<compile_context>
chip_gen: v7x
topology: tpu7x:2x2x1
jax: 0.10.0
libtpu: 0.0.40
codegen_flags: <defaults>
</compile_context>

<pallas_src>
import functools

import jax
import jax.numpy as jnp
from jax.experimental import pallas as pl
from jax.experimental.pallas import tpu as pltpu

NEG_INF = -jnp.inf  # EPT.NEG_INF


def _ept_mha_kernel(q_ref, kv_ref, kim_ref, amask_ref,
                    wqT_ref, bq_ref, wkvT_ref, bkv_ref, woT_ref, bo_ref,
                    out_ref, ctx_scratch, *, num_heads, dim_head):
    Bb, Lq, H = q_ref.shape
    _, Lk, _ = kv_ref.shape
    rows_q = Bb * Lq
    rows_k = Bb * Lk

    # Activations arrive in bf16 (cast on the host) -> straight onto the MXU.
    xq = q_ref[...].reshape(rows_q, H)
    xkv = kv_ref[...].reshape(rows_k, H)

    # Q projection (1/sqrt(dim_head) is folded into Wq^T / bq on the host) and the
    # fused K|V projection: one (rows_k, H) @ (H, 2H) matmul instead of two.
    Q = jnp.dot(xq, wqT_ref[...], preferred_element_type=jnp.float32) + bq_ref[...]
    KV = jnp.dot(xkv, wkvT_ref[...], preferred_element_type=jnp.float32) + bkv_ref[...]

    Q3 = Q.astype(jnp.bfloat16).reshape(Bb, Lq, H)
    KV3 = KV.astype(jnp.bfloat16).reshape(Bb, Lk, 2 * H)

    # Combined mask (nonzero => -inf before softmax), computed once for all heads.
    amask = amask_ref[...].astype(jnp.int32)          # [Lq, Lk]
    kim = kim_ref[...].astype(jnp.int32)              # [Bb, 1, Lk]
    mask = jnp.maximum(amask[None, :, :], kim) > 0    # [Bb, Lq, Lk]

    # TODO(synk): a head-batched einsum (merged Bb*heads batch dim) would remove the
    #             per-head static lane slices; kept static slices for lowering robustness.
    for h in range(num_heads):                        # static unroll, small head count
        ksl = slice(h * dim_head, (h + 1) * dim_head)
        vsl = slice(H + h * dim_head, H + (h + 1) * dim_head)
        Qh = Q3[:, :, ksl]                            # [Bb, Lq, dh]
        Kh = KV3[:, :, ksl]                           # [Bb, Lk, dh]
        Vh = KV3[:, :, vsl]                           # [Bb, Lk, dh]

        # scores = Q_h @ K_h^T, contracting last axes (no explicit transpose).
        s = jnp.einsum('bqd,bkd->bqk', Qh, Kh,
                       preferred_element_type=jnp.float32)   # [Bb, Lq, Lk]
        s = jnp.where(mask, NEG_INF, s)

        # Softmax over keys.  Clamping the row max / denominator makes fully-masked
        # rows yield exactly-zero weights (reference: softmax -> NaN -> masked_fill 0)
        # with no 0*inf NaN path and no per-head dead-row selects.
        m = jnp.max(s, axis=-1, keepdims=True)                 # [Bb, Lq, 1]
        e = jnp.exp(s - jnp.maximum(m, -1e30))                 # dead rows -> all zeros
        denom = jnp.maximum(jnp.sum(e, axis=-1, keepdims=True), 1e-30)
        attn = (e * pl.reciprocal(denom, approx=True)).astype(jnp.bfloat16)

        # context_h = attn @ V_h, written into this head's lane slice of the bf16
        # ctx scratch; the output projection is one full-depth matmul after the loop.
        ctx = jnp.einsum('bqk,bkd->bqd', attn, Vh,
                         preferred_element_type=jnp.float32)   # [Bb, Lq, dh]
        ctx_scratch[:, ksl] = ctx.reshape(rows_q, dim_head).astype(jnp.bfloat16)

    out = (jnp.dot(ctx_scratch[...], woT_ref[...],
                   preferred_element_type=jnp.float32) + bo_ref[...])
    out_ref[...] = out.reshape(Bb, Lq, H).astype(out_ref.dtype)


def _step_vmem_bytes(block_b, Lq, Lk, H):
    """Rough per-grid-step VMEM footprint (pipeline buffers + in-kernel intermediates)."""
    rows_q = block_b * Lq
    rows_k = block_b * Lk
    n = 0
    n += 2 * rows_q * H * 2                      # query block (bf16, double-buffered)
    n += 2 * rows_k * H * 2                      # key_value block (bf16, double-buffered)
    n += 2 * block_b * Lk                        # key-ignorance mask block (int8, x2)
    n += 2 * Lq * Lk                             # attention mask (int8, x2)
    n += 2 * rows_q * H * 4                      # output block (f32, double-buffered)
    n += rows_q * H * 2                          # ctx scratch (bf16)
    n += rows_q * H * 4 + rows_k * 2 * H * 4     # f32 Q and K|V
    n += rows_q * H * 2 + rows_k * 2 * H * 2     # bf16 copies for the MXU
    n += 3 * rows_q * Lk * 4                     # per-head scores / exp / attn (f32)
    return n


def _weight_vmem_bytes(H):
    # Wq^T, Wkv^T, Wo^T (bf16) + biases (f32), double-buffered by the pipeline.
    return 2 * ((H * H + 2 * H * H + H * H) * 2 + 4 * H * 4)


def _vmem_capacity_bytes():
    try:
        return int(pltpu.get_tpu_info().vmem_capacity_bytes)
    except Exception:
        return 64 * 1024 * 1024                  # assume the smallest (v7x per-core VMEM)


def _pick_block_b(batch, Lq, Lk, H):
    """Largest divisor of `batch` whose per-step footprint fits the activation budget,
    while keeping grid length >= 2 (so both v7x TensorCores get work)."""
    cap = _vmem_capacity_bytes()
    budget = max(8 << 20, min(cap // 4, 32 << 20))
    best = 1
    for bb in range(1, batch + 1):
        if batch % bb:
            continue
        if bb > 1 and batch // bb < 2:
            continue
        if _step_vmem_bytes(bb, Lq, Lk, H) <= budget:
            best = bb
    return best


def ept_multi_head_attention(query, key_value, params, *,
                             key_ignorance_mask=None, attention_mask=None,
                             num_heads):
    """Pallas implementation of EPTMultiHeadAttention.forward
    (return_weights=False, dropout_p == 0 as in the reference module)."""
    if key_value is None:
        key_value = query
    B, Lq, H = query.shape
    Bk, Lk, Hk = key_value.shape
    assert H == Hk
    assert H % num_heads == 0
    assert B == Bk or B == 1 or Bk == 1, "non-unit batch sizes must match"
    dim_head = H // num_heads
    batch = max(B, Bk)
    out_dtype = query.dtype

    # bf16 activations: halves HBM->VMEM DMA and the block VMEM footprint; the kernel
    # feeds the MXU with bf16 anyway (f32 accumulation).
    query = query.astype(jnp.bfloat16)
    key_value = key_value.astype(jnp.bfloat16)
    if B == 1 and batch > 1:
        query = jnp.broadcast_to(query, (batch, Lq, H))
    if Bk == 1 and batch > 1:
        key_value = jnp.broadcast_to(key_value, (batch, Lk, H))

    # Masks shipped as int8 (small DMA / VMEM footprint).
    if key_ignorance_mask is None:
        kim = jnp.zeros((batch, 1, Lk), jnp.int8)
    else:
        kim = key_ignorance_mask.astype(jnp.int8).reshape(-1, 1, Lk)
        if kim.shape[0] == 1 and batch > 1:
            kim = jnp.broadcast_to(kim, (batch, 1, Lk))
        assert kim.shape[0] == batch
    if attention_mask is None:
        amask = jnp.zeros((Lq, Lk), jnp.int8)
    else:
        amask = attention_mask.astype(jnp.int8)

    # PyTorch nn.Linear: y = x @ W^T + b, W is [out, in]; pass transposed bf16 weights.
    # 1/sqrt(dim_head) is folded into Wq^T / bq; K and V weights fused into [H, 2H].
    inv_sqrt_dim = 1.0 / (dim_head ** 0.5)
    wqT = (params["wq"].T.astype(jnp.float32) * inv_sqrt_dim).astype(jnp.bfloat16)
    bq = (params["bq"].astype(jnp.float32) * inv_sqrt_dim).reshape(1, H)
    wkvT = jnp.concatenate([params["wk"].T, params["wv"].T], axis=1).astype(jnp.bfloat16)
    bkv = jnp.concatenate([params["bk"], params["bv"]]).reshape(1, 2 * H).astype(jnp.float32)
    woT = params["wo"].T.astype(jnp.bfloat16)
    bo = params["bo"].reshape(1, H).astype(jnp.float32)

    block_b = _pick_block_b(batch, Lq, Lk, H)
    assert batch % block_b == 0
    grid = (batch // block_b,)
    rows_q = block_b * Lq

    need = _step_vmem_bytes(block_b, Lq, Lk, H) + _weight_vmem_bytes(H)
    cap = _vmem_capacity_bytes()
    vmem_limit = int(min(cap - (4 << 20), max(int(1.25 * need), 16 << 20)))

    kernel = functools.partial(_ept_mha_kernel, num_heads=num_heads, dim_head=dim_head)

    batched = lambda b: (b, 0, 0)
    full2d = lambda b: (0, 0)
    return pl.pallas_call(
        kernel,
        out_shape=jax.ShapeDtypeStruct((batch, Lq, H), out_dtype),
        grid=grid,
        in_specs=[
            pl.BlockSpec((block_b, Lq, H), batched),   # query block (bf16)
            pl.BlockSpec((block_b, Lk, H), batched),   # key_value block (bf16)
            pl.BlockSpec((block_b, 1, Lk), batched),   # key_ignorance_mask block (int8)
            pl.BlockSpec((Lq, Lk), full2d),            # attention_mask (int8, shared)
            pl.BlockSpec((H, H), full2d), pl.BlockSpec((1, H), full2d),          # Wq^T, bq
            pl.BlockSpec((H, 2 * H), full2d), pl.BlockSpec((1, 2 * H), full2d),  # Wkv^T, bkv
            pl.BlockSpec((H, H), full2d), pl.BlockSpec((1, H), full2d),          # Wo^T, bo
        ],
        out_specs=pl.BlockSpec((block_b, Lq, H), batched),
        scratch_shapes=[pltpu.VMEM((rows_q, H), jnp.bfloat16)],
        compiler_params=pltpu.CompilerParams(
            dimension_semantics=("parallel",),
            vmem_limit_bytes=vmem_limit,
        ),
    )(query, key_value, kim, amask, wqT, bq, wkvT, bkv, woT, bo)


def _reference_mha(query, key_value, params, kim, amask, num_heads):
    """Pure-JAX (f32) reference matching the PyTorch forward semantics."""
    H = query.shape[-1]
    dh = H // num_heads
    B, Lq, _ = query.shape
    Lk = key_value.shape[1]
    Q = (query @ params["wq"].T + params["bq"]) / (dh ** 0.5)
    K = key_value @ params["wk"].T + params["bk"]
    V = key_value @ params["wv"].T + params["bv"]
    Qh = Q.reshape(B, Lq, num_heads, dh).transpose(0, 2, 1, 3)
    Kh = K.reshape(B, Lk, num_heads, dh).transpose(0, 2, 1, 3)
    Vh = V.reshape(B, Lk, num_heads, dh).transpose(0, 2, 1, 3)
    s = jnp.einsum("bnqd,bnkd->bnqk", Qh, Kh)
    mask = (amask[None, None, :, :] != 0) | (kim.reshape(B, 1, 1, Lk) != 0)
    s = jnp.where(mask, -jnp.inf, s)
    m = jnp.max(s, axis=-1, keepdims=True)
    e = jnp.exp(s - m)
    attn = e / jnp.sum(e, axis=-1, keepdims=True)
    attn = jnp.where(jnp.isnan(attn), 0.0, attn)
    ctx = jnp.einsum("bnqk,bnkd->bnqd", attn, Vh).transpose(0, 2, 1, 3).reshape(B, Lq, H)
    return ctx @ params["wo"].T + params["bo"]


if __name__ == "__main__":
    B, Lq, Lk = 2, 8, 8
    H, NUM_HEADS = 32, 4

    key = jax.random.PRNGKey(0)
    keys = jax.random.split(key, 10)

    query = jax.random.normal(keys[0], (B, Lq, H), jnp.float32)
    key_value = jax.random.normal(keys[1], (B, Lk, H), jnp.float32)

    # Deterministic parameters (PyTorch Linear layout: W [out, in], b [out]).
    params = {
        "wq": 0.05 * jax.random.normal(keys[2], (H, H), jnp.float32),
        "bq": 0.1 * jax.random.normal(keys[3], (H,), jnp.float32),
        "wk": 0.05 * jax.random.normal(keys[4], (H, H), jnp.float32),
        "bk": 0.1 * jax.random.normal(keys[5], (H,), jnp.float32),
        "wv": 0.05 * jax.random.normal(keys[6], (H, H), jnp.float32),
        "bv": 0.1 * jax.random.normal(keys[7], (H,), jnp.float32),
        "wo": 0.05 * jax.random.normal(keys[8], (H, H), jnp.float32),
        "bo": 0.1 * jax.random.normal(keys[9], (H,), jnp.float32),
    }

    # Bool mask semantics: True => masked with -inf before softmax.
    key_ignorance_mask = jnp.zeros((B, Lk), jnp.bool_).at[1, 5].set(True)
    attention_mask = jnp.zeros((Lq, Lk), jnp.bool_).at[0, 3].set(True)

    out = ept_multi_head_attention(
        query, key_value, params,
        key_ignorance_mask=key_ignorance_mask,
        attention_mask=attention_mask,
        num_heads=NUM_HEADS,
    )
    out = jax.block_until_ready(out)

    ref = _reference_mha(
        query, key_value, params,
        key_ignorance_mask.astype(jnp.int32),
        attention_mask.astype(jnp.int32),
        NUM_HEADS,
    )

    assert out.shape == (B, Lq, H)
    # bf16 activations/weights on the MXU + approx reciprocal -> loosened tolerance
    # vs the f32 reference.
    assert jnp.allclose(out, ref, atol=2e-2, rtol=2e-2), \
        f"max abs err {jnp.max(jnp.abs(out - ref))}"
    print("KERNEL_OK")
</pallas_src>

<mosaic_0001>
module attributes {stable_mosaic.version = 11 : i64} {
  func.func @_ept_mha_kernel(%arg0: i32, %arg1: memref<1x8x32xbf16, #tpu.memory_space<vmem>>, %arg2: memref<1x8x32xbf16, #tpu.memory_space<vmem>>, %arg3: memref<1x1x8xi8, #tpu.memory_space<vmem>>, %arg4: memref<8x8xi8, #tpu.memory_space<vmem>>, %arg5: memref<32x32xbf16, #tpu.memory_space<vmem>>, %arg6: memref<1x32xf32, #tpu.memory_space<vmem>>, %arg7: memref<32x64xbf16, #tpu.memory_space<vmem>>, %arg8: memref<1x64xf32, #tpu.memory_space<vmem>>, %arg9: memref<32x32xbf16, #tpu.memory_space<vmem>>, %arg10: memref<1x32xf32, #tpu.memory_space<vmem>>, %arg11: memref<1x8x32xf32, #tpu.memory_space<vmem>>, %arg12: memref<8x32xbf16, #tpu.memory_space<vmem>>) attributes {dimension_semantics = [#tpu.dimension_semantics<parallel>], iteration_bounds = array<i64: 2>, scalar_prefetch = 0 : i64, scratch_operands = 1 : i64, tpu.core_type = #tpu.core_type<tc>, window_params = [{transform_indices = @transform_0, window_bounds = array<i64: 1, 8, 32>}, {transform_indices = @transform_1, window_bounds = array<i64: 1, 8, 32>}, {transform_indices = @transform_2, window_bounds = array<i64: 1, 1, 8>}, {pipeline_mode = #tpu.pipeline_mode<synchronous>, transform_indices = @transform_3, window_bounds = array<i64: 8, 8>}, {pipeline_mode = #tpu.pipeline_mode<synchronous>, transform_indices = @transform_4, window_bounds = array<i64: 32, 32>}, {pipeline_mode = #tpu.pipeline_mode<synchronous>, transform_indices = @transform_5, window_bounds = array<i64: 1, 32>}, {pipeline_mode = #tpu.pipeline_mode<synchronous>, transform_indices = @transform_6, window_bounds = array<i64: 32, 64>}, {pipeline_mode = #tpu.pipeline_mode<synchronous>, transform_indices = @transform_7, window_bounds = array<i64: 1, 64>}, {pipeline_mode = #tpu.pipeline_mode<synchronous>, transform_indices = @transform_8, window_bounds = array<i64: 32, 32>}, {pipeline_mode = #tpu.pipeline_mode<synchronous>, transform_indices = @transform_9, window_bounds = array<i64: 1, 32>}, {transform_indices = @transform_10, window_bounds = array<i64: 1, 8, 32>}]} {
    %c0 = arith.constant 0 : index
    %c0_0 = arith.constant 0 : index
    %c0_1 = arith.constant 0 : index
    %0 = vector.load %arg1[%c0, %c0_0, %c0_1] : memref<1x8x32xbf16, #tpu.memory_space<vmem>>, vector<1x8x32xbf16>
    %1 = vector.shape_cast %0 : vector<1x8x32xbf16> to vector<8x32xbf16>
    %c0_2 = arith.constant 0 : index
    %c0_3 = arith.constant 0 : index
    %c0_4 = arith.constant 0 : index
    %2 = vector.load %arg2[%c0_2, %c0_3, %c0_4] : memref<1x8x32xbf16, #tpu.memory_space<vmem>>, vector<1x8x32xbf16>
    %3 = vector.shape_cast %2 : vector<1x8x32xbf16> to vector<8x32xbf16>
    %c0_5 = arith.constant 0 : index
    %c0_6 = arith.constant 0 : index
    %4 = vector.load %arg5[%c0_5, %c0_6] : memref<32x32xbf16, #tpu.memory_space<vmem>>, vector<32x32xbf16>
    %cst = arith.constant dense<0.000000e+00> : vector<8x32xf32>
    %5 = tpu.matmul %1, %4, %cst {dimension_numbers = #tpu.dot_dimension_numbers<[1], [0], [0], [1], [0, 0, 1, 1], [], []>} : vector<8x32xbf16>, vector<32x32xbf16>, vector<8x32xf32> -> vector<8x32xf32>
    %c0_7 = arith.constant 0 : index
    %c0_8 = arith.constant 0 : index
    %6 = vector.load %arg6[%c0_7, %c0_8] : memref<1x32xf32, #tpu.memory_space<vmem>>, vector<1x32xf32>
    %7 = vector.broadcast %6 : vector<1x32xf32> to vector<8x32xf32>
    %8 = arith.addf %5, %7 : vector<8x32xf32>
    %c0_9 = arith.constant 0 : index
    %c0_10 = arith.constant 0 : index
    %9 = vector.load %arg7[%c0_9, %c0_10] : memref<32x64xbf16, #tpu.memory_space<vmem>>, vector<32x64xbf16>
    %cst_11 = arith.constant dense<0.000000e+00> : vector<8x64xf32>
    %10 = tpu.matmul %3, %9, %cst_11 {dimension_numbers = #tpu.dot_dimension_numbers<[1], [0], [0], [1], [0, 0, 1, 1], [], []>} : vector<8x32xbf16>, vector<32x64xbf16>, vector<8x64xf32> -> vector<8x64xf32>
    %c0_12 = arith.constant 0 : index
    %c0_13 = arith.constant 0 : index
    %11 = vector.load %arg8[%c0_12, %c0_13] : memref<1x64xf32, #tpu.memory_space<vmem>>, vector<1x64xf32>
    %12 = vector.broadcast %11 : vector<1x64xf32> to vector<8x64xf32>
    %13 = arith.addf %10, %12 : vector<8x64xf32>
    %14 = arith.truncf %8 : vector<8x32xf32> to vector<8x32xbf16>
    %15 = vector.shape_cast %14 : vector<8x32xbf16> to vector<1x8x32xbf16>
    %16 = arith.truncf %13 : vector<8x64xf32> to vector<8x64xbf16>
    %17 = vector.shape_cast %16 : vector<8x64xbf16> to vector<1x8x64xbf16>
    %c0_14 = arith.constant 0 : index
    %c0_15 = arith.constant 0 : index
    %18 = vector.load %arg4[%c0_14, %c0_15] : memref<8x8xi8, #tpu.memory_space<vmem>>, vector<8x8xi8>
    %19 = arith.extsi %18 : vector<8x8xi8> to vector<8x8xi32>
    %c0_16 = arith.constant 0 : index
    %c0_17 = arith.constant 0 : index
    %c0_18 = arith.constant 0 : index
    %20 = vector.load %arg3[%c0_16, %c0_17, %c0_18] : memref<1x1x8xi8, #tpu.memory_space<vmem>>, vector<1x1x8xi8>
    %21 = arith.extsi %20 : vector<1x1x8xi8> to vector<1x1x8xi32>
    %22 = vector.shape_cast %19 : vector<8x8xi32> to vector<1x8x8xi32>
    %23 = vector.broadcast %21 : vector<1x1x8xi32> to vector<1x8x8xi32>
    %24 = arith.maxsi %22, %23 : vector<1x8x8xi32>
    %c0_i32 = arith.constant 0 : i32
    %25 = vector.broadcast %c0_i32 : i32 to vector<1x8x8xi32>
    %26 = arith.cmpi sgt, %24, %25 : vector<1x8x8xi32>
    %27 = vector.extract_strided_slice %15 {offsets = [0, 0, 0], sizes = [1, 8, 8], strides = [1, 1, 1]} : vector<1x8x32xbf16> to vector<1x8x8xbf16>
    %28 = vector.extract_strided_slice %17 {offsets = [0, 0, 0], sizes = [1, 8, 8], strides = [1, 1, 1]} : vector<1x8x64xbf16> to vector<1x8x8xbf16>
    %29 = vector.extract_strided_slice %17 {offsets = [0, 0, 32], sizes = [1, 8, 8], strides = [1, 1, 1]} : vector<1x8x64xbf16> to vector<1x8x8xbf16>
    "tpu.trace_start"() <{level = 10 : i32, message = "bqd,bkd->bqk"}> : () -> ()
    %cst_19 = arith.constant dense<0.000000e+00> : vector<1x8x8xf32>
    %30 = tpu.matmul %27, %28, %cst_19 {dimension_numbers = #tpu.dot_dimension_numbers<[2], [2], [1], [1], [0, 0, 0, 1, 1, 1], [0], [0]>} : vector<1x8x8xbf16>, vector<1x8x8xbf16>, vector<1x8x8xf32> -> vector<1x8x8xf32>
    %cst_20 = arith.constant 0xFF800000 : f32
    "tpu.trace_stop"() : () -> ()
    %31 = vector.broadcast %cst_20 : f32 to vector<1x8x8xf32>
    %32 = arith.select %26, %31, %30 : vector<1x8x8xi1>, vector<1x8x8xf32>
    %cst_21 = arith.constant dense<0xFF800000> : vector<1x8xf32>
    %33 = vector.multi_reduction <maximumf>, %32, %cst_21 [2] : vector<1x8x8xf32> to vector<1x8xf32>
    %34 = vector.shape_cast %33 : vector<1x8xf32> to vector<1x8x1xf32>
    %cst_22 = arith.constant -1.000000e+30 : f32
    %35 = vector.broadcast %cst_22 : f32 to vector<1x8x1xf32>
    %36 = arith.maximumf %34, %35 : vector<1x8x1xf32>
    %37 = vector.broadcast %36 : vector<1x8x1xf32> to vector<1x8x8xf32>
    %38 = arith.subf %32, %37 : vector<1x8x8xf32>
    %39 = math.exp %38 : vector<1x8x8xf32>
    %cst_23 = arith.constant dense<0.000000e+00> : vector<1x8xf32>
    %40 = vector.multi_reduction <add>, %39, %cst_23 [2] : vector<1x8x8xf32> to vector<1x8xf32>
    %41 = vector.shape_cast %40 : vector<1x8xf32> to vector<1x8x1xf32>
    %cst_24 = arith.constant 1.000000e-30 : f32
    %42 = vector.broadcast %cst_24 : f32 to vector<1x8x1xf32>
    %43 = arith.maximumf %41, %42 : vector<1x8x1xf32>
    %44 = tpu.reciprocal %43 {approx = true} : vector<1x8x1xf32> -> vector<1x8x1xf32>
    %45 = vector.broadcast %44 : vector<1x8x1xf32> to vector<1x8x8xf32>
    %46 = arith.mulf %39, %45 : vector<1x8x8xf32>
    %47 = arith.truncf %46 : vector<1x8x8xf32> to vector<1x8x8xbf16>
    "tpu.trace_start"() <{level = 10 : i32, message = "bqk,bkd->bqd"}> : () -> ()
    %cst_25 = arith.constant dense<0.000000e+00> : vector<1x8x8xf32>
    %48 = tpu.matmul %47, %29, %cst_25 {dimension_numbers = #tpu.dot_dimension_numbers<[2], [1], [1], [2], [0, 0, 0, 1, 1, 2], [0], [0]>} : vector<1x8x8xbf16>, vector<1x8x8xbf16>, vector<1x8x8xf32> -> vector<1x8x8xf32>
    "tpu.trace_stop"() : () -> ()
    %49 = vector.shape_cast %48 : vector<1x8x8xf32> to vector<8x8xf32>
    %50 = arith.truncf %49 : vector<8x8xf32> to vector<8x8xbf16>
    %c0_26 = arith.constant 0 : index
    %c0_27 = arith.constant 0 : index
    %51 = vector.load %arg12[%c0_26, %c0_27] : memref<8x32xbf16, #tpu.memory_space<vmem>>, vector<8x8xbf16>
    tpu.vector_store %arg12[%c0_26, %c0_27], %50 {strides = array<i32>} : memref<8x32xbf16, #tpu.memory_space<vmem>>, vector<8x8xbf16>,
    %52 = vector.extract_strided_slice %15 {offsets = [0, 0, 8], sizes = [1, 8, 8], strides = [1, 1, 1]} : vector<1x8x32xbf16> to vector<1x8x8xbf16>
    %53 = vector.extract_strided_slice %17 {offsets = [0, 0, 8], sizes = [1, 8, 8], strides = [1, 1, 1]} : vector<1x8x64xbf16> to vector<1x8x8xbf16>
    %54 = vector.extract_strided_slice %17 {offsets = [0, 0, 40], sizes = [1, 8, 8], strides = [1, 1, 1]} : vector<1x8x64xbf16> to vector<1x8x8xbf16>
    "tpu.trace_start"() <{level = 10 : i32, message = "bqd,bkd->bqk"}> : () -> ()
    %cst_28 = arith.constant dense<0.000000e+00> : vector<1x8x8xf32>
    %55 = tpu.matmul %52, %53, %cst_28 {dimension_numbers = #tpu.dot_dimension_numbers<[2], [2], [1], [1], [0, 0, 0, 1, 1, 1], [0], [0]>} : vector<1x8x8xbf16>, vector<1x8x8xbf16>, vector<1x8x8xf32> -> vector<1x8x8xf32>
    %cst_29 = arith.constant 0xFF800000 : f32
    "tpu.trace_stop"() : () -> ()
    %56 = vector.broadcast %cst_29 : f32 to vector<1x8x8xf32>
    %57 = arith.select %26, %56, %55 : vector<1x8x8xi1>, vector<1x8x8xf32>
    %cst_30 = arith.constant dense<0xFF800000> : vector<1x8xf32>
    %58 = vector.multi_reduction <maximumf>, %57, %cst_30 [2] : vector<1x8x8xf32> to vector<1x8xf32>
    %59 = vector.shape_cast %58 : vector<1x8xf32> to vector<1x8x1xf32>
    %cst_31 = arith.constant -1.000000e+30 : f32
    %60 = vector.broadcast %cst_31 : f32 to vector<1x8x1xf32>
    %61 = arith.maximumf %59, %60 : vector<1x8x1xf32>
    %62 = vector.broadcast %61 : vector<1x8x1xf32> to vector<1x8x8xf32>
    %63 = arith.subf %57, %62 : vector<1x8x8xf32>
    %64 = math.exp %63 : vector<1x8x8xf32>
    %cst_32 = arith.constant dense<0.000000e+00> : vector<1x8xf32>
    %65 = vector.multi_reduction <add>, %64, %cst_32 [2] : vector<1x8x8xf32> to vector<1x8xf32>
    %66 = vector.shape_cast %65 : vector<1x8xf32> to vector<1x8x1xf32>
    %cst_33 = arith.constant 1.000000e-30 : f32
    %67 = vector.broadcast %cst_33 : f32 to vector<1x8x1xf32>
    %68 = arith.maximumf %66, %67 : vector<1x8x1xf32>
    %69 = tpu.reciprocal %68 {approx = true} : vector<1x8x1xf32> -> vector<1x8x1xf32>
    %70 = vector.broadcast %69 : vector<1x8x1xf32> to vector<1x8x8xf32>
    %71 = arith.mulf %64, %70 : vector<1x8x8xf32>
    %72 = arith.truncf %71 : vector<1x8x8xf32> to vector<1x8x8xbf16>
    "tpu.trace_start"() <{level = 10 : i32, message = "bqk,bkd->bqd"}> : () -> ()
    %cst_34 = arith.constant dense<0.000000e+00> : vector<1x8x8xf32>
    %73 = tpu.matmul %72, %54, %cst_34 {dimension_numbers = #tpu.dot_dimension_numbers<[2], [1], [1], [2], [0, 0, 0, 1, 1, 2], [0], [0]>} : vector<1x8x8xbf16>, vector<1x8x8xbf16>, vector<1x8x8xf32> -> vector<1x8x8xf32>
    "tpu.trace_stop"() : () -> ()
    %74 = vector.shape_cast %73 : vector<1x8x8xf32> to vector<8x8xf32>
    %75 = arith.truncf %74 : vector<8x8xf32> to vector<8x8xbf16>
    %c0_35 = arith.constant 0 : index
    %c8 = arith.constant 8 : index
    %76 = vector.load %arg12[%c0_35, %c8] : memref<8x32xbf16, #tpu.memory_space<vmem>>, vector<8x8xbf16>
    tpu.vector_store %arg12[%c0_35, %c8], %75 {strides = array<i32>} : memref<8x32xbf16, #tpu.memory_space<vmem>>, vector<8x8xbf16>,
    %77 = vector.extract_strided_slice %15 {offsets = [0, 0, 16], sizes = [1, 8, 8], strides = [1, 1, 1]} : vector<1x8x32xbf16> to vector<1x8x8xbf16>
    %78 = vector.extract_strided_slice %17 {offsets = [0, 0, 16], sizes = [1, 8, 8], strides = [1, 1, 1]} : vector<1x8x64xbf16> to vector<1x8x8xbf16>
    %79 = vector.extract_strided_slice %17 {offsets = [0, 0, 48], sizes = [1, 8, 8], strides = [1, 1, 1]} : vector<1x8x64xbf16> to vector<1x8x8xbf16>
    "tpu.trace_start"() <{level = 10 : i32, message = "bqd,bkd->bqk"}> : () -> ()
    %cst_36 = arith.constant dense<0.000000e+00> : vector<1x8x8xf32>
    %80 = tpu.matmul %77, %78, %cst_36 {dimension_numbers = #tpu.dot_dimension_numbers<[2], [2], [1], [1], [0, 0, 0, 1, 1, 1], [0], [0]>} : vector<1x8x8xbf16>, vector<1x8x8xbf16>, vector<1x8x8xf32> -> vector<1x8x8xf32>
    %cst_37 = arith.constant 0xFF800000 : f32
    "tpu.trace_stop"() : () -> ()
    %81 = vector.broadcast %cst_37 : f32 to vector<1x8x8xf32>
    %82 = arith.select %26, %81, %80 : vector<1x8x8xi1>, vector<1x8x8xf32>
    %cst_38 = arith.constant dense<0xFF800000> : vector<1x8xf32>
    %83 = vector.multi_reduction <maximumf>, %82, %cst_38 [2] : vector<1x8x8xf32> to vector<1x8xf32>
    %84 = vector.shape_cast %83 : vector<1x8xf32> to vector<1x8x1xf32>
    %cst_39 = arith.constant -1.000000e+30 : f32
    %85 = vector.broadcast %cst_39 : f32 to vector<1x8x1xf32>
    %86 = arith.maximumf %84, %85 : vector<1x8x1xf32>
    %87 = vector.broadcast %86 : vector<1x8x1xf32> to vector<1x8x8xf32>
    %88 = arith.subf %82, %87 : vector<1x8x8xf32>
    %89 = math.exp %88 : vector<1x8x8xf32>
    %cst_40 = arith.constant dense<0.000000e+00> : vector<1x8xf32>
    %90 = vector.multi_reduction <add>, %89, %cst_40 [2] : vector<1x8x8xf32> to vector<1x8xf32>
    %91 = vector.shape_cast %90 : vector<1x8xf32> to vector<1x8x1xf32>
    %cst_41 = arith.constant 1.000000e-30 : f32
    %92 = vector.broadcast %cst_41 : f32 to vector<1x8x1xf32>
    %93 = arith.maximumf %91, %92 : vector<1x8x1xf32>
    %94 = tpu.reciprocal %93 {approx = true} : vector<1x8x1xf32> -> vector<1x8x1xf32>
    %95 = vector.broadcast %94 : vector<1x8x1xf32> to vector<1x8x8xf32>
    %96 = arith.mulf %89, %95 : vector<1x8x8xf32>
    %97 = arith.truncf %96 : vector<1x8x8xf32> to vector<1x8x8xbf16>
    "tpu.trace_start"() <{level = 10 : i32, message = "bqk,bkd->bqd"}> : () -> ()
    %cst_42 = arith.constant dense<0.000000e+00> : vector<1x8x8xf32>
    %98 = tpu.matmul %97, %79, %cst_42 {dimension_numbers = #tpu.dot_dimension_numbers<[2], [1], [1], [2], [0, 0, 0, 1, 1, 2], [0], [0]>} : vector<1x8x8xbf16>, vector<1x8x8xbf16>, vector<1x8x8xf32> -> vector<1x8x8xf32>
    "tpu.trace_stop"() : () -> ()
    %99 = vector.shape_cast %98 : vector<1x8x8xf32> to vector<8x8xf32>
    %100 = arith.truncf %99 : vector<8x8xf32> to vector<8x8xbf16>
    %c0_43 = arith.constant 0 : index
    %c16 = arith.constant 16 : index
    %101 = vector.load %arg12[%c0_43, %c16] : memref<8x32xbf16, #tpu.memory_space<vmem>>, vector<8x8xbf16>
    tpu.vector_store %arg12[%c0_43, %c16], %100 {strides = array<i32>} : memref<8x32xbf16, #tpu.memory_space<vmem>>, vector<8x8xbf16>,
    %102 = vector.extract_strided_slice %15 {offsets = [0, 0, 24], sizes = [1, 8, 8], strides = [1, 1, 1]} : vector<1x8x32xbf16> to vector<1x8x8xbf16>
    %103 = vector.extract_strided_slice %17 {offsets = [0, 0, 24], sizes = [1, 8, 8], strides = [1, 1, 1]} : vector<1x8x64xbf16> to vector<1x8x8xbf16>
    %104 = vector.extract_strided_slice %17 {offsets = [0, 0, 56], sizes = [1, 8, 8], strides = [1, 1, 1]} : vector<1x8x64xbf16> to vector<1x8x8xbf16>
    "tpu.trace_start"() <{level = 10 : i32, message = "bqd,bkd->bqk"}> : () -> ()
    %cst_44 = arith.constant dense<0.000000e+00> : vector<1x8x8xf32>
    %105 = tpu.matmul %102, %103, %cst_44 {dimension_numbers = #tpu.dot_dimension_numbers<[2], [2], [1], [1], [0, 0, 0, 1, 1, 1], [0], [0]>} : vector<1x8x8xbf16>, vector<1x8x8xbf16>, vector<1x8x8xf32> -> vector<1x8x8xf32>
    %cst_45 = arith.constant 0xFF800000 : f32
    "tpu.trace_stop"() : () -> ()
    %106 = vector.broadcast %cst_45 : f32 to vector<1x8x8xf32>
    %107 = arith.select %26, %106, %105 : vector<1x8x8xi1>, vector<1x8x8xf32>
    %cst_46 = arith.constant dense<0xFF800000> : vector<1x8xf32>
    %108 = vector.multi_reduction <maximumf>, %107, %cst_46 [2] : vector<1x8x8xf32> to vector<1x8xf32>
    %109 = vector.shape_cast %108 : vector<1x8xf32> to vector<1x8x1xf32>
    %cst_47 = arith.constant -1.000000e+30 : f32
    %110 = vector.broadcast %cst_47 : f32 to vector<1x8x1xf32>
    %111 = arith.maximumf %109, %110 : vector<1x8x1xf32>
    %112 = vector.broadcast %111 : vector<1x8x1xf32> to vector<1x8x8xf32>
    %113 = arith.subf %107, %112 : vector<1x8x8xf32>
    %114 = math.exp %113 : vector<1x8x8xf32>
    %cst_48 = arith.constant dense<0.000000e+00> : vector<1x8xf32>
    %115 = vector.multi_reduction <add>, %114, %cst_48 [2] : vector<1x8x8xf32> to vector<1x8xf32>
    %116 = vector.shape_cast %115 : vector<1x8xf32> to vector<1x8x1xf32>
    %cst_49 = arith.constant 1.000000e-30 : f32
    %117 = vector.broadcast %cst_49 : f32 to vector<1x8x1xf32>
    %118 = arith.maximumf %116, %117 : vector<1x8x1xf32>
    %119 = tpu.reciprocal %118 {approx = true} : vector<1x8x1xf32> -> vector<1x8x1xf32>
    %120 = vector.broadcast %119 : vector<1x8x1xf32> to vector<1x8x8xf32>
    %121 = arith.mulf %114, %120 : vector<1x8x8xf32>
    %122 = arith.truncf %121 : vector<1x8x8xf32> to vector<1x8x8xbf16>
    "tpu.trace_start"() <{level = 10 : i32, message = "bqk,bkd->bqd"}> : () -> ()
    %cst_50 = arith.constant dense<0.000000e+00> : vector<1x8x8xf32>
    %123 = tpu.matmul %122, %104, %cst_50 {dimension_numbers = #tpu.dot_dimension_numbers<[2], [1], [1], [2], [0, 0, 0, 1, 1, 2], [0], [0]>} : vector<1x8x8xbf16>, vector<1x8x8xbf16>, vector<1x8x8xf32> -> vector<1x8x8xf32>
    "tpu.trace_stop"() : () -> ()
    %124 = vector.shape_cast %123 : vector<1x8x8xf32> to vector<8x8xf32>
    %125 = arith.truncf %124 : vector<8x8xf32> to vector<8x8xbf16>
    %c0_51 = arith.constant 0 : index
    %c24 = arith.constant 24 : index
    %126 = vector.load %arg12[%c0_51, %c24] : memref<8x32xbf16, #tpu.memory_space<vmem>>, vector<8x8xbf16>
    tpu.vector_store %arg12[%c0_51, %c24], %125 {strides = array<i32>} : memref<8x32xbf16, #tpu.memory_space<vmem>>, vector<8x8xbf16>,
    %c0_52 = arith.constant 0 : index
    %c0_53 = arith.constant 0 : index
    %127 = vector.load %arg12[%c0_52, %c0_53] : memref<8x32xbf16, #tpu.memory_space<vmem>>, vector<8x32xbf16>
    %c0_54 = arith.constant 0 : index
    %c0_55 = arith.constant 0 : index
    %128 = vector.load %arg9[%c0_54, %c0_55] : memref<32x32xbf16, #tpu.memory_space<vmem>>, vector<32x32xbf16>
    %cst_56 = arith.constant dense<0.000000e+00> : vector<8x32xf32>
    %129 = tpu.matmul %127, %128, %cst_56 {dimension_numbers = #tpu.dot_dimension_numbers<[1], [0], [0], [1], [0, 0, 1, 1], [], []>} : vector<8x32xbf16>, vector<32x32xbf16>, vector<8x32xf32> -> vector<8x32xf32>
    %c0_57 = arith.constant 0 : index
    %c0_58 = arith.constant 0 : index
    %130 = vector.load %arg10[%c0_57, %c0_58] : memref<1x32xf32, #tpu.memory_space<vmem>>, vector<1x32xf32>
    %131 = vector.broadcast %130 : vector<1x32xf32> to vector<8x32xf32>
    %132 = arith.addf %129, %131 : vector<8x32xf32>
    %133 = vector.shape_cast %132 : vector<8x32xf32> to vector<1x8x32xf32>
    %c0_59 = arith.constant 0 : index
    %c0_60 = arith.constant 0 : index
    %c0_61 = arith.constant 0 : index
    %134 = vector.load %arg11[%c0_59, %c0_60, %c0_61] : memref<1x8x32xf32, #tpu.memory_space<vmem>>, vector<1x8x32xf32>
    tpu.vector_store %arg11[%c0_59, %c0_60, %c0_61], %133 {strides = array<i32>} : memref<1x8x32xf32, #tpu.memory_space<vmem>>, vector<1x8x32xf32>,
    return
  }
  func.func @transform_0(%arg0: i32) -> (i32, i32, i32) {
    %c0_i32 = arith.constant 0 : i32
    %c0_i32_0 = arith.constant 0 : i32
    %c0_i32_1 = arith.constant 0 : i32
    return %arg0, %c0_i32, %c0_i32_0 : i32, i32, i32
  }
  func.func @transform_1(%arg0: i32) -> (i32, i32, i32) {
    %c0_i32 = arith.constant 0 : i32
    %c0_i32_0 = arith.constant 0 : i32
    %c0_i32_1 = arith.constant 0 : i32
    return %arg0, %c0_i32, %c0_i32_0 : i32, i32, i32
  }
  func.func @transform_2(%arg0: i32) -> (i32, i32, i32) {
    %c0_i32 = arith.constant 0 : i32
    %c0_i32_0 = arith.constant 0 : i32
    %c0_i32_1 = arith.constant 0 : i32
    return %arg0, %c0_i32, %c0_i32_0 : i32, i32, i32
  }
  func.func @transform_3(%arg0: i32) -> (i32, i32) {
    %c0_i32 = arith.constant 0 : i32
    %c0_i32_0 = arith.constant 0 : i32
    %c0_i32_1 = arith.constant 0 : i32
    return %c0_i32, %c0_i32_0 : i32, i32
  }
  func.func @transform_4(%arg0: i32) -> (i32, i32) {
    %c0_i32 = arith.constant 0 : i32
    %c0_i32_0 = arith.constant 0 : i32
    %c0_i32_1 = arith.constant 0 : i32
    return %c0_i32, %c0_i32_0 : i32, i32
  }
  func.func @transform_5(%arg0: i32) -> (i32, i32) {
    %c0_i32 = arith.constant 0 : i32
    %c0_i32_0 = arith.constant 0 : i32
    %c0_i32_1 = arith.constant 0 : i32
    return %c0_i32, %c0_i32_0 : i32, i32
  }
  func.func @transform_6(%arg0: i32) -> (i32, i32) {
    %c0_i32 = arith.constant 0 : i32
    %c0_i32_0 = arith.constant 0 : i32
    %c0_i32_1 = arith.constant 0 : i32
    return %c0_i32, %c0_i32_0 : i32, i32
  }
  func.func @transform_7(%arg0: i32) -> (i32, i32) {
    %c0_i32 = arith.constant 0 : i32
    %c0_i32_0 = arith.constant 0 : i32
    %c0_i32_1 = arith.constant 0 : i32
    return %c0_i32, %c0_i32_0 : i32, i32
  }
  func.func @transform_8(%arg0: i32) -> (i32, i32) {
    %c0_i32 = arith.constant 0 : i32
    %c0_i32_0 = arith.constant 0 : i32
    %c0_i32_1 = arith.constant 0 : i32
    return %c0_i32, %c0_i32_0 : i32, i32
  }
  func.func @transform_9(%arg0: i32) -> (i32, i32) {
    %c0_i32 = arith.constant 0 : i32
    %c0_i32_0 = arith.constant 0 : i32
    %c0_i32_1 = arith.constant 0 : i32
    return %c0_i32, %c0_i32_0 : i32, i32
  }
  func.func @transform_10(%arg0: i32) -> (i32, i32, i32) {
    %c0_i32 = arith.constant 0 : i32
    %c0_i32_0 = arith.constant 0 : i32
    %c0_i32_1 = arith.constant 0 : i32
    return %arg0, %c0_i32, %c0_i32_0 : i32, i32, i32
  }
}

</mosaic_0001>

<llo_original>
// kernel: tpu_custom_call.1
$region0: #{tpu_custom_call.1}
  #allocation0 [shape = 'u32[]', space=smem, size = 0x4, offset = 0x4, fixed_abs, tag = 'smem constant byte address 0x4 - core index']
  #allocation1 [shape = 'u32[144,128]{1,0:T(1,128)}', space=vmem, size = 0x12000, scoped, tag = 'internal scratch']
  #allocation2 [shape = 'bf16[8,32]{1,0:T(8,128)(2,1)}', space=vmem, size = 0x800, scoped, tag = 'scratch operand']
  %s0 = inlined_call_operand.hbm [shape: bf16[2,8,32], index: 0, kind: input, shape index: {}]
  %s1 = inlined_call_operand.hbm [shape: bf16[2,8,32], index: 1, kind: input, shape index: {}]
  %s2 = inlined_call_operand.vmem [shape: s8[2,1,8], index: 2, kind: input, shape index: {}]
  %s3 = inlined_call_operand.vmem [shape: s8[8,8], index: 3, kind: input, shape index: {}]
  %s4 = inlined_call_operand.vmem [shape: bf16[32,32], index: 4, kind: input, shape index: {}]
  %s5 = inlined_call_operand.hbm [shape: f32[1,32], index: 5, kind: input, shape index: {}]
  %s6 = inlined_call_operand.hbm [shape: bf16[32,64], index: 6, kind: input, shape index: {}]
  %s7 = inlined_call_operand.hbm [shape: f32[1,64], index: 7, kind: input, shape index: {}]
  %s8 = inlined_call_operand.vmem [shape: bf16[32,32], index: 8, kind: input, shape index: {}]
  %s9 = inlined_call_operand.vmem [shape: f32[1,32], index: 9, kind: input, shape index: {}]
  %s10 = inlined_call_operand.hbm [shape: f32[2,8,32], index: 10, kind: output, shape index: {}]
  %s11 = sld [smem:[#allocation0]]
  $region93: #{tpu_custom_call.1} parent=0
    _
  %s13 = ssub.s32 1, %s11
  %s14 = scalar_select 0, %s13, %s11
  $region1: #{tpu_custom_call.1} parent=0
    #allocation3 [shape = 'u8[4096]{0}', space=vmem, size = 0x1000, scoped, tag = 'input window, operand 0']
    #allocation4 [shape = 's32[2]{0}', space=sflag, size = 0x8, scoped, tag = 'scoped memory for tpu_custom_call.1']
    #allocation5 [shape = 's32[2]{0}', space=sflag, size = 0x8, scoped, tag = 'scoped memory for tpu_custom_call.1']
    #allocation6 [shape = 'u8[4096]{0}', space=vmem, size = 0x1000, scoped, tag = 'input window, operand 1']
    #allocation7 [shape = 's32[2]{0}', space=sflag, size = 0x8, scoped, tag = 'scoped memory for tpu_custom_call.1']
    #allocation8 [shape = 'u8[512]{0}', space=vmem, size = 0x400, scoped, tag = 'input window, operand 5, single buffered']
    #allocation9 [shape = 'u8[8192]{0}', space=vmem, size = 0x2000, scoped, tag = 'input window, operand 6, single buffered']
    #allocation10 [shape = 's32[1]{0}', space=sflag, size = 0x4, scoped, tag = 'scoped memory for tpu_custom_call.1']
    #allocation11 [shape = 'u8[512]{0}', space=vmem, size = 0x400, scoped, tag = 'input window, operand 7, single buffered']
    #allocation12 [shape = 'u8[8192]{0}', space=vmem, size = 0x2000, scoped, tag = 'output window, operand 0']
    %15 = vsyncpa [#allocation4], 0
    %s16 = scalar_lea.sflag [#allocation4], 1
    %17 = vsyncpa %s16, 0
    %18 = vsyncpa [#allocation7], 0
    %s19 = scalar_lea.sflag [#allocation7], 1
    %20 = vsyncpa %s19, 0
    %21 = vsyncpa [#allocation10], 0
    %22 = vsyncpa [#allocation5], 0
    %s23 = scalar_lea.sflag [#allocation5], 1
    %24 = vsyncpa %s23, 0
    loop: start=0, step=1, limit=4
    $region2: #{tpu_custom_call.1} parent=1 // loop_pre_header
      _
    $region3: #{tpu_custom_call.1} parent=1 // loop_header
      %s26 = sphi 0, %s30
      %p27 = scmp.ge.s32.totalorder %s26, 4
      %s36 = sphi 0, %s38
      %s39 = sphi 0, %s36
      %s40 = sphi 0, %s39
      %s56 = sphi 0, %s40
      %s62 = sphi 0, %s64
      %s65 = sphi 0, %s62
      %s66 = sphi 0, %s65
      %s82 = sphi 0, %s66
      %s88 = sphi 0, %s90
      %s91 = sphi 0, %s88
      %s92 = sphi 0, %s91
      %s108 = sphi 0, %s92
      %s112 = sphi 0, %s112
      %s114 = sphi 0, %s112
      %s115 = sphi 0, %s114
      %s129 = sphi 0, %s115
      %s133 = sphi 0, %s133
      %s135 = sphi 0, %s133
      %s136 = sphi 0, %s135
      %s150 = sphi 0, %s136
      %s154 = sphi 0, %s154
      %s156 = sphi 0, %s154
      %s157 = sphi 0, %s156
      %s171 = sphi 0, %s157
      %s175 = sphi 0, %s175
      %s177 = sphi 0, %s175
      %s178 = sphi 0, %s177
      %s192 = sphi 0, %s178
      %s196 = sphi 0, %s196
      %s198 = sphi 0, %s196
      %s199 = sphi 0, %s198
      %s213 = sphi 0, %s199
      %s217 = sphi 0, %s217
      %s219 = sphi 0, %s217
      %s220 = sphi 0, %s219
      %s234 = sphi 0, %s220
      %s238 = sphi 0, %s238
      %s240 = sphi 0, %s238
      %s241 = sphi 0, %s240
      %s255 = sphi 0, %s241
      %s261 = sphi 0, %s263
      %s264 = sphi 0, %s261
      %s265 = sphi 0, %s264
      %s281 = sphi 0, %s265
    $region4: #{tpu_custom_call.1} parent=1 // loop_header_branch
      %29 = sbr.rel (%p27) target = $region8
    $region5: #{tpu_custom_call.1} parent=1 // loop_body
      %s31 = ssub.s32 %s26, 1
      %s32 = ssub.s32 %s26, 2
      %s33 = sadd.s32 %s26, 1
      %s34 = ssub.s32 %s26, %s33
      %p35 = scmp.eq.s32.totalorder %s34, 0
      %s37 = sadd.s32 %s36, 1
      %s38 = scalar_select %p35, %s36, %s37
      %p41 = pneg %p35
      %p42 = scmp.eq.s32.totalorder %s26, 1
      %p43 = por %p41, %p42
      %p44 = scmp.ne.s32.totalorder %s36, %s39
      %p45 = scmp.eq.s32.totalorder %s26, 0
      %p46 = por %p44, %p45
      %p47 = scmp.ne.s32.totalorder %s36, %s39
      %p48 = scmp.eq.s32.totalorder %s31, 1
      %p49 = por %p47, %p48
      %p50 = scmp.ne.s32.totalorder %s39, %s40
      %p51 = scmp.eq.s32.totalorder %s31, 0
      %p52 = por %p50, %p51
      %p53 = scmp.ne.s32.totalorder %s39, %s40
      %p54 = scmp.eq.s32.totalorder %s32, 1
      %p55 = por %p53, %p54
      %p57 = scmp.ne.s32.totalorder %s40, %s56
      %p58 = scmp.eq.s32.totalorder %s32, 0
      %p59 = por %p57, %p58
      %s60 = ssub.s32 %s26, %s33
      %p61 = scmp.eq.s32.totalorder %s60, 0
      %s63 = sadd.s32 %s62, 1
      %s64 = scalar_select %p61, %s62, %s63
      %p67 = pneg %p61
      %p68 = scmp.eq.s32.totalorder %s26, 1
      %p69 = por %p67, %p68
      %p70 = scmp.ne.s32.totalorder %s62, %s65
      %p71 = scmp.eq.s32.totalorder %s26, 0
      %p72 = por %p70, %p71
      %p73 = scmp.ne.s32.totalorder %s62, %s65
      %p74 = scmp.eq.s32.totalorder %s31, 1
      %p75 = por %p73, %p74
      %p76 = scmp.ne.s32.totalorder %s65, %s66
      %p77 = scmp.eq.s32.totalorder %s31, 0
      %p78 = por %p76, %p77
      %p79 = scmp.ne.s32.totalorder %s65, %s66
      %p80 = scmp.eq.s32.totalorder %s32, 1
      %p81 = por %p79, %p80
      %p83 = scmp.ne.s32.totalorder %s66, %s82
      %p84 = scmp.eq.s32.totalorder %s32, 0
      %p85 = por %p83, %p84
      %s86 = ssub.s32 %s26, %s33
      %p87 = scmp.eq.s32.totalorder %s86, 0
      %s89 = sadd.s32 %s88, 1
      %s90 = scalar_select %p87, %s88, %s89
      %p93 = pneg %p87
      %p94 = scmp.eq.s32.totalorder %s26, 1
      %p95 = por %p93, %p94
      %p96 = scmp.ne.s32.totalorder %s88, %s91
      %p97 = scmp.eq.s32.totalorder %s26, 0
      %p98 = por %p96, %p97
      %p99 = scmp.ne.s32.totalorder %s88, %s91
      %p100 = scmp.eq.s32.totalorder %s31, 1
      %p101 = por %p99, %p100
      %p102 = scmp.ne.s32.totalorder %s91, %s92
      %p103 = scmp.eq.s32.totalorder %s31, 0
      %p104 = por %p102, %p103
      %p105 = scmp.ne.s32.totalorder %s91, %s92
      %p106 = scmp.eq.s32.totalorder %s32, 1
      %p107 = por %p105, %p106
      %p109 = scmp.ne.s32.totalorder %s92, %s108
      %p110 = scmp.eq.s32.totalorder %s32, 0
      %p111 = por %p109, %p110
      %s113 = sadd.s32 %s112, 1
      %p116 = scmp.eq.s32.totalorder %s26, 1
      %p117 = scmp.ne.s32.totalorder %s112, %s114
      %p118 = scmp.eq.s32.totalorder %s26, 0
      %p119 = por %p117, %p118
      %p120 = scmp.ne.s32.totalorder %s112, %s114
      %p121 = scmp.eq.s32.totalorder %s31, 1
      %p122 = por %p120, %p121
      %p123 = scmp.ne.s32.totalorder %s114, %s115
      %p124 = scmp.eq.s32.totalorder %s31, 0
      %p125 = por %p123, %p124
      %p126 = scmp.ne.s32.totalorder %s114, %s115
      %p127 = scmp.eq.s32.totalorder %s32, 1
      %p128 = por %p126, %p127
      %p130 = scmp.ne.s32.totalorder %s115, %s129
      %p131 = scmp.eq.s32.totalorder %s32, 0
      %p132 = por %p130, %p131
      %s134 = sadd.s32 %s133, 1
      %p137 = scmp.eq.s32.totalorder %s26, 1
      %p138 = scmp.ne.s32.totalorder %s133, %s135
      %p139 = scmp.eq.s32.totalorder %s26, 0
      %p140 = por %p138, %p139
      %p141 = scmp.ne.s32.totalorder %s133, %s135
      %p142 = scmp.eq.s32.totalorder %s31, 1
      %p143 = por %p141, %p142
      %p144 = scmp.ne.s32.totalorder %s135, %s136
      %p145 = scmp.eq.s32.totalorder %s31, 0
      %p146 = por %p144, %p145
      %p147 = scmp.ne.s32.totalorder %s135, %s136
      %p148 = scmp.eq.s32.totalorder %s32, 1
      %p149 = por %p147, %p148
      %p151 = scmp.ne.s32.totalorder %s136, %s150
      %p152 = scmp.eq.s32.totalorder %s32, 0
      %p153 = por %p151, %p152
      %s155 = sadd.s32 %s154, 1
      %p158 = scmp.eq.s32.totalorder %s26, 1
      %p159 = scmp.ne.s32.totalorder %s154, %s156
      %p160 = scmp.eq.s32.totalorder %s26, 0
      %p161 = por %p159, %p160
      %p162 = scmp.ne.s32.totalorder %s154, %s156
      %p163 = scmp.eq.s32.totalorder %s31, 1
      %p164 = por %p162, %p163
      %p165 = scmp.ne.s32.totalorder %s156, %s157
      %p166 = scmp.eq.s32.totalorder %s31, 0
      %p167 = por %p165, %p166
      %p168 = scmp.ne.s32.totalorder %s156, %s157
      %p169 = scmp.eq.s32.totalorder %s32, 1
      %p170 = por %p168, %p169
      %p172 = scmp.ne.s32.totalorder %s157, %s171
      %p173 = scmp.eq.s32.totalorder %s32, 0
      %p174 = por %p172, %p173
      %s176 = sadd.s32 %s175, 1
      %p179 = scmp.eq.s32.totalorder %s26, 1
      %p180 = scmp.ne.s32.totalorder %s175, %s177
      %p181 = scmp.eq.s32.totalorder %s26, 0
      %p182 = por %p180, %p181
      %p183 = scmp.ne.s32.totalorder %s175, %s177
      %p184 = scmp.eq.s32.totalorder %s31, 1
      %p185 = por %p183, %p184
      %p186 = scmp.ne.s32.totalorder %s177, %s178
      %p187 = scmp.eq.s32.totalorder %s31, 0
      %p188 = por %p186, %p187
      %p189 = scmp.ne.s32.totalorder %s177, %s178
      %p190 = scmp.eq.s32.totalorder %s32, 1
      %p191 = por %p189, %p190
      %p193 = scmp.ne.s32.totalorder %s178, %s192
      %p194 = scmp.eq.s32.totalorder %s32, 0
      %p195 = por %p193, %p194
      %s197 = sadd.s32 %s196, 1
      %p200 = scmp.eq.s32.totalorder %s26, 1
      %p201 = scmp.ne.s32.totalorder %s196, %s198
      %p202 = scmp.eq.s32.totalorder %s26, 0
      %p203 = por %p201, %p202
      %p204 = scmp.ne.s32.totalorder %s196, %s198
      %p205 = scmp.eq.s32.totalorder %s31, 1
      %p206 = por %p204, %p205
      %p207 = scmp.ne.s32.totalorder %s198, %s199
      %p208 = scmp.eq.s32.totalorder %s31, 0
      %p209 = por %p207, %p208
      %p210 = scmp.ne.s32.totalorder %s198, %s199
      %p211 = scmp.eq.s32.totalorder %s32, 1
      %p212 = por %p210, %p211
      %p214 = scmp.ne.s32.totalorder %s199, %s213
      %p215 = scmp.eq.s32.totalorder %s32, 0
      %p216 = por %p214, %p215
      %s218 = sadd.s32 %s217, 1
      %p221 = scmp.eq.s32.totalorder %s26, 1
      %p222 = scmp.ne.s32.totalorder %s217, %s219
      %p223 = scmp.eq.s32.totalorder %s26, 0
      %p224 = por %p222, %p223
      %p225 = scmp.ne.s32.totalorder %s217, %s219
      %p226 = scmp.eq.s32.totalorder %s31, 1
      %p227 = por %p225, %p226
      %p228 = scmp.ne.s32.totalorder %s219, %s220
      %p229 = scmp.eq.s32.totalorder %s31, 0
      %p230 = por %p228, %p229
      %p231 = scmp.ne.s32.totalorder %s219, %s220
      %p232 = scmp.eq.s32.totalorder %s32, 1
      %p233 = por %p231, %p232
      %p235 = scmp.ne.s32.totalorder %s220, %s234
      %p236 = scmp.eq.s32.totalorder %s32, 0
      %p237 = por %p235, %p236
      %s239 = sadd.s32 %s238, 1
      %p242 = scmp.eq.s32.totalorder %s26, 1
      %p243 = scmp.ne.s32.totalorder %s238, %s240
      %p244 = scmp.eq.s32.totalorder %s26, 0
      %p245 = por %p243, %p244
      %p246 = scmp.ne.s32.totalorder %s238, %s240
      %p247 = scmp.eq.s32.totalorder %s31, 1
      %p248 = por %p246, %p247
      %p249 = scmp.ne.s32.totalorder %s240, %s241
      %p250 = scmp.eq.s32.totalorder %s31, 0
      %p251 = por %p249, %p250
      %p252 = scmp.ne.s32.totalorder %s240, %s241
      %p253 = scmp.eq.s32.totalorder %s32, 1
      %p254 = por %p252, %p253
      %p256 = scmp.ne.s32.totalorder %s241, %s255
      %p257 = scmp.eq.s32.totalorder %s32, 0
      %p258 = por %p256, %p257
      %s259 = ssub.s32 %s26, %s33
      %p260 = scmp.eq.s32.totalorder %s259, 0
      %s262 = sadd.s32 %s261, 1
      %s263 = scalar_select %p260, %s261, %s262
      %p266 = pneg %p260
      %p267 = scmp.eq.s32.totalorder %s26, 1
      %p268 = por %p266, %p267
      %p269 = scmp.ne.s32.totalorder %s261, %s264
      %p270 = scmp.eq.s32.totalorder %s26, 0
      %p271 = por %p269, %p270
      %p272 = scmp.ne.s32.totalorder %s261, %s264
      %p273 = scmp.eq.s32.totalorder %s31, 1
      %p274 = por %p272, %p273
      %p275 = scmp.ne.s32.totalorder %s264, %s265
      %p276 = scmp.eq.s32.totalorder %s31, 0
      %p277 = por %p275, %p276
      %p278 = scmp.ne.s32.totalorder %s264, %s265
      %p279 = scmp.eq.s32.totalorder %s32, 1
      %p280 = por %p278, %p279
      %p282 = scmp.ne.s32.totalorder %s265, %s281
      %p283 = scmp.eq.s32.totalorder %s32, 0
      %p284 = por %p282, %p283
      %p285 = scmp.le.s32.totalorder 1, %s26
      %p286 = scmp.lt.s32.totalorder %s26, 3
      %p287 = pnand %p285, %p286
      %p288 = pneg %p287
      // Predicated region
      $region9: #{tpu_custom_call.1} parent=5 // pred_check
        _
      $region10: #{tpu_custom_call.1} parent=5 // pred_check_branch
        %290 = sbr.rel (%p287) target = $region12
      $region11: #{tpu_custom_call.1} parent=5 // pred_region
        %s291 = ssub.s32 %s26, 1
        // Predicated region
        $region13: #{tpu_custom_call.1} parent=11 // pred_check
          %p292 = pneg %p125
        $region14: #{tpu_custom_call.1} parent=11 // pred_check_branch
          %294 = sbr.rel (%p292) target = $region16
        $region15: #{tpu_custom_call.1} parent=11 // pred_region
          _
        $region16: #{tpu_custom_call.1} parent=11 // pred_fallthru
          _
        // Predicated region
        $region17: #{tpu_custom_call.1} parent=11 // pred_check
          %p295 = pneg %p146
        $region18: #{tpu_custom_call.1} parent=11 // pred_check_branch
          %297 = sbr.rel (%p295) target = $region20
        $region19: #{tpu_custom_call.1} parent=11 // pred_region
          _
        $region20: #{tpu_custom_call.1} parent=11 // pred_fallthru
          _
        // Predicated region
        $region21: #{tpu_custom_call.1} parent=11 // pred_check
          %p298 = pneg %p167
        $region22: #{tpu_custom_call.1} parent=11 // pred_check_branch
          %300 = sbr.rel (%p298) target = $region24
        $region23: #{tpu_custom_call.1} parent=11 // pred_region
          %s302 = ssub.s32 16, 16
          %303 = vsyncadd [#allocation7], %s302
          %s305 = sshll.u32 [#allocation8], 4
          %s306 = int_to_ptr.vmem [resolvable:$true] %s305
          %308 = dma.hbm_to_vmem [thread:$0]  %s5, 16, %s306, [#allocation7]
        $region24: #{tpu_custom_call.1} parent=11 // pred_fallthru
          _
        // Predicated region
        $region25: #{tpu_custom_call.1} parent=11 // pred_check
          %p309 = pneg %p188
        $region26: #{tpu_custom_call.1} parent=11 // pred_check_branch
          %311 = sbr.rel (%p309) target = $region28
        $region27: #{tpu_custom_call.1} parent=11 // pred_region
          %s313 = ssub.s32 256, 256
          %314 = vsyncadd [#allocation10], %s313
          %s315 = sshll.u32 [#allocation9], 4
          %s316 = int_to_ptr.vmem [resolvable:$true] %s315
          %321 = dma.hbm_to_vmem [thread:$0]  %s6, 256, %s316, [#allocation10], 64, 64, 4
        $region28: #{tpu_custom_call.1} parent=11 // pred_fallthru
          _
        // Predicated region
        $region29: #{tpu_custom_call.1} parent=11 // pred_check
          %p322 = pneg %p209
        $region30: #{tpu_custom_call.1} parent=11 // pred_check_branch
          %324 = sbr.rel (%p322) target = $region32
        $region31: #{tpu_custom_call.1} parent=11 // pred_region
          %s326 = ssub.s32 16, 16
          %327 = vsyncadd [#allocation10], %s326
          %s329 = sshll.u32 [#allocation11], 4
          %s330 = int_to_ptr.vmem [resolvable:$true] %s329
          %332 = dma.hbm_to_vmem [thread:$0]  %s7, 16, %s330, [#allocation10]
        $region32: #{tpu_custom_call.1} parent=11 // pred_fallthru
          _
        // Predicated region
        $region33: #{tpu_custom_call.1} parent=11 // pred_check
          %p333 = pneg %p230
        $region34: #{tpu_custom_call.1} parent=11 // pred_check_branch
          %335 = sbr.rel (%p333) target = $region36
        $region35: #{tpu_custom_call.1} parent=11 // pred_region
          _
        $region36: #{tpu_custom_call.1} parent=11 // pred_fallthru
          _
        // Predicated region
        $region37: #{tpu_custom_call.1} parent=11 // pred_check
          %p336 = pneg %p251
        $region38: #{tpu_custom_call.1} parent=11 // pred_check_branch
          %338 = sbr.rel (%p336) target = $region40
        $region39: #{tpu_custom_call.1} parent=11 // pred_region
          _
        $region40: #{tpu_custom_call.1} parent=11 // pred_fallthru
          _
      $region12: #{tpu_custom_call.1} parent=5 // pred_fallthru
        _
      %p339 = scmp.lt.s32.totalorder %s26, 2
      // Predicated region
      $region41: #{tpu_custom_call.1} parent=5 // pred_check
        %p340 = pneg %p339
      $region42: #{tpu_custom_call.1} parent=5 // pred_check_branch
        %342 = sbr.rel (%p340) target = $region44
      $region43: #{tpu_custom_call.1} parent=5 // pred_region
        // Predicated region
        $region45: #{tpu_custom_call.1} parent=43 // pred_check
          %p343 = pneg %p46
        $region46: #{tpu_custom_call.1} parent=43 // pred_check_branch
          %345 = sbr.rel (%p343) target = $region48
        $region47: #{tpu_custom_call.1} parent=43 // pred_region
          %s346 = sand.u32 %s36, 1
          %s347 = scalar_lea.sflag [#allocation4], %s346
          %s348 = sand.u32 %s36, 1
          %s349 = smul.addr %s348, 4
          %s350 = scalar_lea.vmem [#allocation3], %s349
          %s352 = ssub.s32 64, 64
          %353 = vsyncadd %s347, %s352
          %s354 = smul.addr %s26, 64
          %s355 = scalar_lea.hbm %s0, %s354
          %s357 = sshll.u32 %s350, 4
          %s358 = int_to_ptr.vmem [resolvable:$true] %s357
          %360 = dma.hbm_to_vmem [thread:$0]  %s355, 64, %s358, %s347
        $region48: #{tpu_custom_call.1} parent=43 // pred_fallthru
          _
        // Predicated region
        $region49: #{tpu_custom_call.1} parent=43 // pred_check
          %p361 = pneg %p72
        $region50: #{tpu_custom_call.1} parent=43 // pred_check_branch
          %363 = sbr.rel (%p361) target = $region52
        $region51: #{tpu_custom_call.1} parent=43 // pred_region
          %s364 = sand.u32 %s26, 1
          %s365 = scalar_lea.sflag [#allocation7], %s364
          %s366 = sand.u32 %s62, 1
          %s367 = smul.addr %s366, 4
          %s368 = scalar_lea.vmem [#allocation6], %s367
          %s370 = ssub.s32 64, 64
          %371 = vsyncadd %s365, %s370
          %s372 = smul.addr %s26, 64
          %s373 = scalar_lea.hbm %s1, %s372
          %s375 = sshll.u32 %s368, 4
          %s376 = int_to_ptr.vmem [resolvable:$true] %s375
          %378 = dma.hbm_to_vmem [thread:$0]  %s373, 64, %s376, %s365
        $region52: #{tpu_custom_call.1} parent=43 // pred_fallthru
          _
        // Predicated region
        $region53: #{tpu_custom_call.1} parent=43 // pred_check
          %p379 = pneg %p98
        $region54: #{tpu_custom_call.1} parent=43 // pred_check_branch
          %381 = sbr.rel (%p379) target = $region56
        $region55: #{tpu_custom_call.1} parent=43 // pred_region
          %p382 = scmp.lt.s32.totalorder %s26, 1
          %s383 = scalar_select %p382, %s26, 1
          %s384 = scalar_lea.vmem %s2, %s383
        $region56: #{tpu_custom_call.1} parent=43 // pred_fallthru
          _
      $region44: #{tpu_custom_call.1} parent=5 // pred_fallthru
        _
      %p385 = scmp.le.s32.totalorder 1, %s26
      %p386 = scmp.lt.s32.totalorder %s26, 3
      %p387 = pnand %p385, %p386
      %p388 = pneg %p387
      // Predicated region
      $region57: #{tpu_custom_call.1} parent=5 // pred_check
        _
      $region58: #{tpu_custom_call.1} parent=5 // pred_check_branch
        %390 = sbr.rel (%p387) target = $region60
      $region59: #{tpu_custom_call.1} parent=5 // pred_region
        %s391 = ssub.s32 %s26, 1
        %s392 = sand.u32 %s39, 1
        %s393 = scalar_lea.sflag [#allocation4], %s392
        %s394 = sand.u32 %s39, 1
        %s395 = smul.addr %s394, 4
        %s396 = scalar_lea.vmem [#allocation3], %s395
        // Predicated region
        $region61: #{tpu_custom_call.1} parent=59 // pred_check
          %p397 = pneg %p52
        $region62: #{tpu_custom_call.1} parent=59 // pred_check_branch
          %399 = sbr.rel (%p397) target = $region64
        $region63: #{tpu_custom_call.1} parent=59 // pred_region
          %400 = dma.done %s393, 64
        $region64: #{tpu_custom_call.1} parent=59 // pred_fallthru
          _
        %s401 = sand.u32 %s31, 1
        %s402 = scalar_lea.sflag [#allocation7], %s401
        %s403 = sand.u32 %s65, 1
        %s404 = smul.addr %s403, 4
        %s405 = scalar_lea.vmem [#allocation6], %s404
        // Predicated region
        $region65: #{tpu_custom_call.1} parent=59 // pred_check
          %p406 = pneg %p78
        $region66: #{tpu_custom_call.1} parent=59 // pred_check_branch
          %408 = sbr.rel (%p406) target = $region68
        $region67: #{tpu_custom_call.1} parent=59 // pred_region
          %409 = dma.done %s402, 64
        $region68: #{tpu_custom_call.1} parent=59 // pred_fallthru
          _
        // Predicated region
        $region69: #{tpu_custom_call.1} parent=59 // pred_check
          %p410 = pneg %p167
        $region70: #{tpu_custom_call.1} parent=59 // pred_check_branch
          %412 = sbr.rel (%p410) target = $region72
        $region71: #{tpu_custom_call.1} parent=59 // pred_region
          %413 = dma.done [#allocation7], 16
        $region72: #{tpu_custom_call.1} parent=59 // pred_fallthru
          _
        // Predicated region
        $region73: #{tpu_custom_call.1} parent=59 // pred_check
          %p414 = pneg %p188
        $region74: #{tpu_custom_call.1} parent=59 // pred_check_branch
          %416 = sbr.rel (%p414) target = $region76
        $region75: #{tpu_custom_call.1} parent=59 // pred_region
          %417 = dma.done [#allocation10], 256
        $region76: #{tpu_custom_call.1} parent=59 // pred_fallthru
          _
        // Predicated region
        $region77: #{tpu_custom_call.1} parent=59 // pred_check
          %p418 = pneg %p209
        $region78: #{tpu_custom_call.1} parent=59 // pred_check_branch
          %420 = sbr.rel (%p418) target = $region80
        $region79: #{tpu_custom_call.1} parent=59 // pred_region
          %421 = dma.done [#allocation10], 16
        $region80: #{tpu_custom_call.1} parent=59 // pred_fallthru
          _
        %s422 = sand.u32 %s39, 1
        %s423 = scalar_lea.sflag [#allocation4], %s422
        %s424 = sand.u32 %s39, 1
        %s425 = smul.addr %s424, 4
        %s426 = scalar_lea.vmem [#allocation3], %s425
        %p427 = pneg %p52
        %p428 = pneg %p49
        %s429 = sand.u32 %s31, 1
        %s430 = scalar_lea.sflag [#allocation7], %s429
        %s431 = sand.u32 %s65, 1
        %s432 = smul.addr %s431, 4
        %s433 = scalar_lea.vmem [#allocation6], %s432
        %p434 = pneg %p78
        %p435 = pneg %p75
        %p436 = scmp.lt.s32.totalorder %s31, 1
        %s437 = scalar_select %p436, %s31, 1
        %s438 = scalar_lea.vmem %s2, %s437
        %p439 = pneg %p104
        %p440 = pneg %p101
        %p441 = pneg %p125
        %p442 = pneg %p122
        %p443 = pneg %p146
        %p444 = pneg %p143
        %p445 = pneg %p167
        %p446 = pneg %p164
        %p447 = pneg %p188
        %p448 = pneg %p185
        %p449 = pneg %p209
        %p450 = pneg %p206
        %p451 = pneg %p230
        %p452 = pneg %p227
        %p453 = pneg %p251
        %p454 = pneg %p248
        %p455 = pneg %p277
        %p456 = pneg %p274
        %s457 = sand.u32 %s264, 1
        %s458 = scalar_lea.sflag [#allocation5], %s457
        %s459 = sand.u32 %s264, 1
        %s460 = smul.addr %s459, 8
        %s461 = scalar_lea.vmem [#allocation12], %s460
        %p462 = scmp.lt.s32.totalorder %s31, 1
        %s463 = scalar_select %p462, %s31, 1
        %s464 = scalar_lea.vmem %s2, %s463
        %v466 = vld [vmem:[%s396] sm:$0xf]
        %v467 = vld [vmem:[%s405] sm:$0xf]
        %v468 = vld [vmem:[%s4] sm:$0xf]
        %v469 = vld [vmem:[%s4 + $0x4] sm:$0xf]
        %v470 = vld [vmem:[%s4 + $0x8] sm:$0xf]
        %v471 = vld [vmem:[%s4 + $0xc] sm:$0xf]
        %v472 = vld [vmem:[#allocation8] sm:$0x1]
        %v474 = vlaneseq
        %v475 = vshrl.u32 %v474, 7
        %v476 = vsub.s32 0, %v475
        %v477 = vrot.slane %v472, %v476
        %v483 = vunpack.c.l.b16 %v468
        %v484 = vunpack.c.l.b16 %v469
        %v485 = vunpack.c.l.b16 %v470
        %v486 = vunpack.c.l.b16 %v471
        %v487 = vpack.c.b16 %v484, %v483
        %v488 = vpack.c.b16 %v486, %v485
        %vm491 = vcmask 261120
        %v493 = vsel %vm491, %v466, 0
        %495 = vmatprep.subr.bf16.mxu0 0
        %496 = vmatpush1.bf16.msra.mxu0 %v487
        %497 = vmatprep.subr.bf16.mxu0 0
        %498 = vmatpush1.bf16.msra.mxu0 %v488
        %499 = vmatprep.subr.bf16.mxu0 0
        %500 = vmatpush1.bf16.msra.mxu0 0
        %501 = vmatprep.subr.bf16.mxu0 0
        %502 = vmatpush1.bf16.msra.mxu0 0
        %503 = vmatprep.subr.bf16.mxu0 0
        %504 = vmatpush1.bf16.msra.mxu0 0
        %505 = vmatprep.subr.bf16.mxu0 0
        %506 = vmatpush1.bf16.msra.mxu0 0
        %507 = vmatprep.subr.bf16.mxu0 0
        %508 = vmatpush1.bf16.msra.mxu0 0
        %509 = vmatprep.subr.bf16.mxu0 0
        %510 = vmatpush1.bf16.msra.mxu0 0
        %511 = vmatprep.subr.bf16.mxu0 0
        %512 = vmatpush1.bf16.msra.mxu0 0
        %513 = vmatprep.subr.bf16.mxu0 0
        %514 = vmatpush1.bf16.msra.mxu0 0
        %515 = vmatprep.subr.bf16.mxu0 0
        %516 = vmatpush1.bf16.msra.mxu0 0
        %517 = vmatprep.subr.bf16.mxu0 0
        %518 = vmatpush1.bf16.msra.mxu0 0
        %519 = vmatprep.subr.bf16.mxu0 0
        %520 = vmatpush1.bf16.msra.mxu0 0
        %521 = vmatprep.subr.bf16.mxu0 0
        %522 = vmatpush1.bf16.msra.mxu0 0
        %523 = vmatprep.subr.bf16.mxu0 0
        %524 = vmatpush1.bf16.msra.mxu0 0
        %525 = vmatprep.subr.bf16.mxu0 0
        %526 = vmatpush1.bf16.msra.mxu0 0
        %527 = vmatprep.mubr.bf16.mxu0 0
        %528 = vmatmul.mubr.bf16.gmra.mrb[0].mxu0 %v493
        %v529 = vpop.f32.mrb[0].mxu0
        %v530 = vadd.f32 %v477, %v529
        %v531 = vpop.f32.mrb[0].mxu0
        %v532 = vpop.f32.mrb[0].mxu0
        %v533 = vpop.f32.mrb[0].mxu0
        %534 = vdwg.mxu0
        %v535 = vld [vmem:[#allocation9] sm:$0xf]
        %v536 = vld [vmem:[#allocation9 + $0x4] sm:$0xf]
        %v537 = vld [vmem:[#allocation9 + $0x8] sm:$0xf]
        %v538 = vld [vmem:[#allocation9 + $0xc] sm:$0xf]
        %v539 = vld [vmem:[#allocation11] sm:$0x1]
        %v541 = vlaneseq
        %v542 = vshrl.u32 %v541, 7
        %v543 = vsub.s32 0, %v542
        %v544 = vrot.slane %v539, %v543
        %v550 = vunpack.c.l.b16 %v535
        %v551 = vunpack.c.l.b16 %v536
        %v552 = vunpack.c.l.b16 %v537
        %v553 = vunpack.c.l.b16 %v538
        %v554 = vpack.c.b16 %v551, %v550
        %v555 = vpack.c.b16 %v553, %v552
        %v559 = vsel %vm491, %v467, 0
        %561 = vmatprep.subr.bf16.mxu0 0
        %562 = vmatpush1.bf16.msra.mxu0 %v554
        %563 = vmatprep.subr.bf16.mxu0 0
        %564 = vmatpush1.bf16.msra.mxu0 %v555
        %565 = vmatprep.subr.bf16.mxu0 0
        %566 = vmatpush1.bf16.msra.mxu0 0
        %567 = vmatprep.subr.bf16.mxu0 0
        %568 = vmatpush1.bf16.msra.mxu0 0
        %569 = vmatprep.subr.bf16.mxu0 0
        %570 = vmatpush1.bf16.msra.mxu0 0
        %571 = vmatprep.subr.bf16.mxu0 0
        %572 = vmatpush1.bf16.msra.mxu0 0
        %573 = vmatprep.subr.bf16.mxu0 0
        %574 = vmatpush1.bf16.msra.mxu0 0
        %575 = vmatprep.subr.bf16.mxu0 0
        %576 = vmatpush1.bf16.msra.mxu0 0
        %577 = vmatprep.subr.bf16.mxu0 0
        %578 = vmatpush1.bf16.msra.mxu0 0
        %579 = vmatprep.subr.bf16.mxu0 0
        %580 = vmatpush1.bf16.msra.mxu0 0
        %581 = vmatprep.subr.bf16.mxu0 0
        %582 = vmatpush1.bf16.msra.mxu0 0
        %583 = vmatprep.subr.bf16.mxu0 0
        %584 = vmatpush1.bf16.msra.mxu0 0
        %585 = vmatprep.subr.bf16.mxu0 0
        %586 = vmatpush1.bf16.msra.mxu0 0
        %587 = vmatprep.subr.bf16.mxu0 0
        %588 = vmatpush1.bf16.msra.mxu0 0
        %589 = vmatprep.subr.bf16.mxu0 0
        %590 = vmatpush1.bf16.msra.mxu0 0
        %591 = vmatprep.subr.bf16.mxu0 0
        %592 = vmatpush1.bf16.msra.mxu0 0
        %593 = vmatprep.mubr.bf16.mxu0 0
        %594 = vmatmul.mubr.bf16.gmra.mrb[0].mxu0 %v559
        %v595 = vpop.f32.mrb[0].mxu0
        %v596 = vadd.f32 %v544, %v595
        %v597 = vpop.f32.mrb[0].mxu0
        %v598 = vpop.f32.mrb[0].mxu0
        %v599 = vpop.f32.mrb[0].mxu0
        %600 = vdwg.mxu0
        %v601 = vpack.c.bf16 %v530, %v530
        %v602 = vpack.c.bf16 %v596, %v596
        %v603 = vld [vmem:[%s3] sm:$0x3]
        %v604 = vunpack.c.0.s8 %v603
        %v605 = vld [vmem:[%s464] sm:$0x1]
        %v606 = vunpack.c.0.s8 %v605
        %v607 = vlaneseq
        %v608 = vshrl.u32 %v607, 7
        %v609 = vsub.s32 0, %v608
        %v610 = vrot.slane %v606, %v609
        %vm611 = vcmp.gt.s32.totalorder %v604, %v610
        %v612 = vsel %vm611, %v604, %v610
        %vm613 = vcmp.gt.s32.totalorder %v612, 0
        %vm614 = vcmask 64512
        %v616 = vsel %vm614, %v601, 0
        %v619 = vsel %vm614, %v602, 0
        %621 = vmatprep.subr.bf16.mxu0 0
        %622 = vmatpush1.bf16.xpose.msra.mxu0 %v619
        %623 = vmatprep.subr.bf16.mxu0 0
        %624 = vmatpush1.bf16.xpose.msra.mxu0 0
        %625 = vmatprep.subr.bf16.mxu0 0
        %626 = vmatpush1.bf16.xpose.msra.mxu0 0
        %627 = vmatprep.subr.bf16.mxu0 0
        %628 = vmatpush1.bf16.xpose.msra.mxu0 0
        %629 = vmatprep.subr.bf16.mxu0 0
        %630 = vmatpush1.bf16.xpose.msra.mxu0 0
        %631 = vmatprep.subr.bf16.mxu0 0
        %632 = vmatpush1.bf16.xpose.msra.mxu0 0
        %633 = vmatprep.subr.bf16.mxu0 0
        %634 = vmatpush1.bf16.xpose.msra.mxu0 0
        %635 = vmatprep.subr.bf16.mxu0 0
        %636 = vmatpush1.bf16.xpose.msra.mxu0 0
        %637 = vmatprep.subr.bf16.mxu0 0
        %638 = vmatpush1.bf16.xpose.msra.mxu0 0
        %639 = vmatprep.subr.bf16.mxu0 0
        %640 = vmatpush1.bf16.xpose.msra.mxu0 0
        %641 = vmatprep.subr.bf16.mxu0 0
        %642 = vmatpush1.bf16.xpose.msra.mxu0 0
        %643 = vmatprep.subr.bf16.mxu0 0
        %644 = vmatpush1.bf16.xpose.msra.mxu0 0
        %645 = vmatprep.subr.bf16.mxu0 0
        %646 = vmatpush1.bf16.xpose.msra.mxu0 0
        %647 = vmatprep.subr.bf16.mxu0 0
        %648 = vmatpush1.bf16.xpose.msra.mxu0 0
        %649 = vmatprep.subr.bf16.mxu0 0
        %650 = vmatpush1.bf16.xpose.msra.mxu0 0
        %651 = vmatprep.subr.bf16.mxu0 0
        %652 = vmatpush1.bf16.xpose.msra.mxu0 0
        %653 = vmatprep.mubr.bf16.mxu0 0
        %654 = vmatmul.mubr.bf16.gmra.mrb[0].mxu0 %v616
        %v655 = vpop.f32.mrb[0].mxu0
        %v656 = vadd.f32 0.0, %v655
        %v657 = vpop.f32.mrb[0].mxu0
        %v658 = vpop.f32.mrb[0].mxu0
        %v659 = vpop.f32.mrb[0].mxu0
        %660 = vdwg.mxu0
        %v661 = vsel %vm613, -inf, %v656
        %v662 = vsel %vm614, %v661, -inf
        %663 = vmax.xlane.f32.xlu0 %v662
        %v664 = vpop.xlane.xlu0 %663
        %v665 = vmax.f32 %v664, -1e+30
        %v666 = vsub.f32 %v661, %v665
        %v667 = vmul.f32 %v666, 1.442695
        %v668 = vpow.pop %v667
        %v669 = vsel %vm614, %v668, 0.0
        %670 = vadd.xlane.f32.xlu0 %v669
        %v671 = vpop.xlane.xlu0 %670
        %v672 = vmax.f32 %v671, 1e-30
        %v673 = vrcp.pop %v672
        %v674 = vmul.f32 %v668, %v673
        %v675 = vpack.c.bf16 %v674, %v674
        %677 = vrot.lane.b32.xlu0 %v602, 96
        %v678 = vpop.permute.xlu0 %677
        %v680 = vsel %vm614, %v675, 0
        %vm682 = vcmask 1043456
        %v684 = vsel %vm682, %v678, 0
        %686 = vmatprep.subr.bf16.mxu0 0
        %687 = vmatpush1.bf16.msra.mxu0 %v684
        %688 = vmatprep.subr.bf16.mxu0 0
        %689 = vmatpush1.bf16.msra.mxu0 0
        %690 = vmatprep.subr.bf16.mxu0 0
        %691 = vmatpush1.bf16.msra.mxu0 0
        %692 = vmatprep.subr.bf16.mxu0 0
        %693 = vmatpush1.bf16.msra.mxu0 0
        %694 = vmatprep.subr.bf16.mxu0 0
        %695 = vmatpush1.bf16.msra.mxu0 0
        %696 = vmatprep.subr.bf16.mxu0 0
        %697 = vmatpush1.bf16.msra.mxu0 0
        %698 = vmatprep.subr.bf16.mxu0 0
        %699 = vmatpush1.bf16.msra.mxu0 0
        %700 = vmatprep.subr.bf16.mxu0 0
        %701 = vmatpush1.bf16.msra.mxu0 0
        %702 = vmatprep.subr.bf16.mxu0 0
        %703 = vmatpush1.bf16.msra.mxu0 0
        %704 = vmatprep.subr.bf16.mxu0 0
        %705 = vmatpush1.bf16.msra.mxu0 0
        %706 = vmatprep.subr.bf16.mxu0 0
        %707 = vmatpush1.bf16.msra.mxu0 0
        %708 = vmatprep.subr.bf16.mxu0 0
        %709 = vmatpush1.bf16.msra.mxu0 0
        %710 = vmatprep.subr.bf16.mxu0 0
        %711 = vmatpush1.bf16.msra.mxu0 0
        %712 = vmatprep.subr.bf16.mxu0 0
        %713 = vmatpush1.bf16.msra.mxu0 0
        %714 = vmatprep.subr.bf16.mxu0 0
        %715 = vmatpush1.bf16.msra.mxu0 0
        %716 = vmatprep.subr.bf16.mxu0 0
        %717 = vmatpush1.bf16.msra.mxu0 0
        %718 = vmatprep.mubr.bf16.mxu0 0
        %719 = vmatmul.mubr.bf16.gmra.mrb[0].mxu0 %v680
        %v720 = vpop.f32.mrb[0].mxu0
        %v721 = vadd.f32 0.0, %v720
        %v722 = vpop.f32.mrb[0].mxu0
        %v723 = vpop.f32.mrb[0].mxu0
        %v724 = vpop.f32.mrb[0].mxu0
        %725 = vdwg.mxu0
        %v726 = vpack.c.bf16 %v721, %v721
        %vm727 = vcmask 60416
        %728 = vst.msk [vmem:[#allocation2] sm:$0xf] %vm727, %v726
        %730 = vrot.lane.b32.xlu0 %v601, 120
        %v731 = vpop.permute.xlu0 %730
        %732 = vrot.lane.b32.xlu0 %v602, 120
        %v733 = vpop.permute.xlu0 %732
        %v735 = vsel %vm614, %v731, 0
        %v738 = vsel %vm614, %v733, 0
        %740 = vmatprep.subr.bf16.mxu0 0
        %741 = vmatpush1.bf16.xpose.msra.mxu0 %v738
        %742 = vmatprep.subr.bf16.mxu0 0
        %743 = vmatpush1.bf16.xpose.msra.mxu0 0
        %744 = vmatprep.subr.bf16.mxu0 0
        %745 = vmatpush1.bf16.xpose.msra.mxu0 0
        %746 = vmatprep.subr.bf16.mxu0 0
        %747 = vmatpush1.bf16.xpose.msra.mxu0 0
        %748 = vmatprep.subr.bf16.mxu0 0
        %749 = vmatpush1.bf16.xpose.msra.mxu0 0
        %750 = vmatprep.subr.bf16.mxu0 0
        %751 = vmatpush1.bf16.xpose.msra.mxu0 0
        %752 = vmatprep.subr.bf16.mxu0 0
        %753 = vmatpush1.bf16.xpose.msra.mxu0 0
        %754 = vmatprep.subr.bf16.mxu0 0
        %755 = vmatpush1.bf16.xpose.msra.mxu0 0
        %756 = vmatprep.subr.bf16.mxu0 0
        %757 = vmatpush1.bf16.xpose.msra.mxu0 0
        %758 = vmatprep.subr.bf16.mxu0 0
        %759 = vmatpush1.bf16.xpose.msra.mxu0 0
        %760 = vmatprep.subr.bf16.mxu0 0
        %761 = vmatpush1.bf16.xpose.msra.mxu0 0
        %762 = vmatprep.subr.bf16.mxu0 0
        %763 = vmatpush1.bf16.xpose.msra.mxu0 0
        %764 = vmatprep.subr.bf16.mxu0 0
        %765 = vmatpush1.bf16.xpose.msra.mxu0 0
        %766 = vmatprep.subr.bf16.mxu0 0
        %767 = vmatpush1.bf16.xpose.msra.mxu0 0
        %768 = vmatprep.subr.bf16.mxu0 0
        %769 = vmatpush1.bf16.xpose.msra.mxu0 0
        %770 = vmatprep.subr.bf16.mxu0 0
        %771 = vmatpush1.bf16.xpose.msra.mxu0 0
        %772 = vmatprep.mubr.bf16.mxu0 0
        %773 = vmatmul.mubr.bf16.gmra.mrb[0].mxu0 %v735
        %v774 = vpop.f32.mrb[0].mxu0
        %v775 = vadd.f32 0.0, %v774
        %v776 = vpop.f32.mrb[0].mxu0
        %v777 = vpop.f32.mrb[0].mxu0
        %v778 = vpop.f32.mrb[0].mxu0
        %779 = vdwg.mxu0
        %v780 = vsel %vm613, -inf, %v775
        %v781 = vsel %vm614, %v780, -inf
        %782 = vmax.xlane.f32.xlu0 %v781
        %v783 = vpop.xlane.xlu0 %782
        %v784 = vmax.f32 %v783, -1e+30
        %v785 = vsub.f32 %v780, %v784
        %v786 = vmul.f32 %v785, 1.442695
        %v787 = vpow.pop %v786
        %v788 = vsel %vm614, %v787, 0.0
        %789 = vadd.xlane.f32.xlu0 %v788
        %v790 = vpop.xlane.xlu0 %789
        %v791 = vmax.f32 %v790, 1e-30
        %v792 = vrcp.pop %v791
        %v793 = vmul.f32 %v787, %v792
        %v794 = vpack.c.bf16 %v793, %v793
        %795 = vrot.lane.b32.xlu0 %v602, 88
        %v796 = vpop.permute.xlu0 %795
        %v798 = vsel %vm614, %v794, 0
        %v801 = vsel %vm682, %v796, 0
        %803 = vmatprep.subr.bf16.mxu0 0
        %804 = vmatpush1.bf16.msra.mxu0 %v801
        %805 = vmatprep.subr.bf16.mxu0 0
        %806 = vmatpush1.bf16.msra.mxu0 0
        %807 = vmatprep.subr.bf16.mxu0 0
        %808 = vmatpush1.bf16.msra.mxu0 0
        %809 = vmatprep.subr.bf16.mxu0 0
        %810 = vmatpush1.bf16.msra.mxu0 0
        %811 = vmatprep.subr.bf16.mxu0 0
        %812 = vmatpush1.bf16.msra.mxu0 0
        %813 = vmatprep.subr.bf16.mxu0 0
        %814 = vmatpush1.bf16.msra.mxu0 0
        %815 = vmatprep.subr.bf16.mxu0 0
        %816 = vmatpush1.bf16.msra.mxu0 0
        %817 = vmatprep.subr.bf16.mxu0 0
        %818 = vmatpush1.bf16.msra.mxu0 0
        %819 = vmatprep.subr.bf16.mxu0 0
        %820 = vmatpush1.bf16.msra.mxu0 0
        %821 = vmatprep.subr.bf16.mxu0 0
        %822 = vmatpush1.bf16.msra.mxu0 0
        %823 = vmatprep.subr.bf16.mxu0 0
        %824 = vmatpush1.bf16.msra.mxu0 0
        %825 = vmatprep.subr.bf16.mxu0 0
        %826 = vmatpush1.bf16.msra.mxu0 0
        %827 = vmatprep.subr.bf16.mxu0 0
        %828 = vmatpush1.bf16.msra.mxu0 0
        %829 = vmatprep.subr.bf16.mxu0 0
        %830 = vmatpush1.bf16.msra.mxu0 0
        %831 = vmatprep.subr.bf16.mxu0 0
        %832 = vmatpush1.bf16.msra.mxu0 0
        %833 = vmatprep.subr.bf16.mxu0 0
        %834 = vmatpush1.bf16.msra.mxu0 0
        %835 = vmatprep.mubr.bf16.mxu0 0
        %836 = vmatmul.mubr.bf16.gmra.mrb[0].mxu0 %v798
        %v837 = vpop.f32.mrb[0].mxu0
        %v838 = vadd.f32 0.0, %v837
        %v839 = vpop.f32.mrb[0].mxu0
        %v840 = vpop.f32.mrb[0].mxu0
        %v841 = vpop.f32.mrb[0].mxu0
        %842 = vdwg.mxu0
        %v843 = vpack.c.bf16 %v838, %v838
        %v845 = vunpack.c.l.b16 %v843
        %v846 = vpack.c.b16 %v845, %v845
        %847 = vrot.lane.b32.xlu0 %v846, 8
        %v848 = vpop.permute.xlu0 %847
        %vm850 = vcmask 126016
        %851 = vst.msk [vmem:[#allocation2] sm:$0xf] %vm850, %v848
        %852 = vrot.lane.b32.xlu0 %v601, 112
        %v853 = vpop.permute.xlu0 %852
        %854 = vrot.lane.b32.xlu0 %v602, 112
        %v855 = vpop.permute.xlu0 %854
        %v857 = vsel %vm614, %v853, 0
        %v860 = vsel %vm614, %v855, 0
        %862 = vmatprep.subr.bf16.mxu0 0
        %863 = vmatpush1.bf16.xpose.msra.mxu0 %v860
        %864 = vmatprep.subr.bf16.mxu0 0
        %865 = vmatpush1.bf16.xpose.msra.mxu0 0
        %866 = vmatprep.subr.bf16.mxu0 0
        %867 = vmatpush1.bf16.xpose.msra.mxu0 0
        %868 = vmatprep.subr.bf16.mxu0 0
        %869 = vmatpush1.bf16.xpose.msra.mxu0 0
        %870 = vmatprep.subr.bf16.mxu0 0
        %871 = vmatpush1.bf16.xpose.msra.mxu0 0
        %872 = vmatprep.subr.bf16.mxu0 0
        %873 = vmatpush1.bf16.xpose.msra.mxu0 0
        %874 = vmatprep.subr.bf16.mxu0 0
        %875 = vmatpush1.bf16.xpose.msra.mxu0 0
        %876 = vmatprep.subr.bf16.mxu0 0
        %877 = vmatpush1.bf16.xpose.msra.mxu0 0
        %878 = vmatprep.subr.bf16.mxu0 0
        %879 = vmatpush1.bf16.xpose.msra.mxu0 0
        %880 = vmatprep.subr.bf16.mxu0 0
        %881 = vmatpush1.bf16.xpose.msra.mxu0 0
        %882 = vmatprep.subr.bf16.mxu0 0
        %883 = vmatpush1.bf16.xpose.msra.mxu0 0
        %884 = vmatprep.subr.bf16.mxu0 0
        %885 = vmatpush1.bf16.xpose.msra.mxu0 0
        %886 = vmatprep.subr.bf16.mxu0 0
        %887 = vmatpush1.bf16.xpose.msra.mxu0 0
        %888 = vmatprep.subr.bf16.mxu0 0
        %889 = vmatpush1.bf16.xpose.msra.mxu0 0
        %890 = vmatprep.subr.bf16.mxu0 0
        %891 = vmatpush1.bf16.xpose.msra.mxu0 0
        %892 = vmatprep.subr.bf16.mxu0 0
        %893 = vmatpush1.bf16.xpose.msra.mxu0 0
        %894 = vmatprep.mubr.bf16.mxu0 0
        %895 = vmatmul.mubr.bf16.gmra.mrb[0].mxu0 %v857
        %v896 = vpop.f32.mrb[0].mxu0
        %v897 = vadd.f32 0.0, %v896
        %v898 = vpop.f32.mrb[0].mxu0
        %v899 = vpop.f32.mrb[0].mxu0
        %v900 = vpop.f32.mrb[0].mxu0
        %901 = vdwg.mxu0
        %v902 = vsel %vm613, -inf, %v897
        %v903 = vsel %vm614, %v902, -inf
        %904 = vmax.xlane.f32.xlu0 %v903
        %v905 = vpop.xlane.xlu0 %904
        %v906 = vmax.f32 %v905, -1e+30
        %v907 = vsub.f32 %v902, %v906
        %v908 = vmul.f32 %v907, 1.442695
        %v909 = vpow.pop %v908
        %v910 = vsel %vm614, %v909, 0.0
        %911 = vadd.xlane.f32.xlu0 %v910
        %v912 = vpop.xlane.xlu0 %911
        %v913 = vmax.f32 %v912, 1e-30
        %v914 = vrcp.pop %v913
        %v915 = vmul.f32 %v909, %v914
        %v916 = vpack.c.bf16 %v915, %v915
        %917 = vrot.lane.b32.xlu0 %v602, 80
        %v918 = vpop.permute.xlu0 %917
        %v920 = vsel %vm614, %v916, 0
        %v923 = vsel %vm682, %v918, 0
        %925 = vmatprep.subr.bf16.mxu0 0
        %926 = vmatpush1.bf16.msra.mxu0 %v923
        %927 = vmatprep.subr.bf16.mxu0 0
        %928 = vmatpush1.bf16.msra.mxu0 0
        %929 = vmatprep.subr.bf16.mxu0 0
        %930 = vmatpush1.bf16.msra.mxu0 0
        %931 = vmatprep.subr.bf16.mxu0 0
        %932 = vmatpush1.bf16.msra.mxu0 0
        %933 = vmatprep.subr.bf16.mxu0 0
        %934 = vmatpush1.bf16.msra.mxu0 0
        %935 = vmatprep.subr.bf16.mxu0 0
        %936 = vmatpush1.bf16.msra.mxu0 0
        %937 = vmatprep.subr.bf16.mxu0 0
        %938 = vmatpush1.bf16.msra.mxu0 0
        %939 = vmatprep.subr.bf16.mxu0 0
        %940 = vmatpush1.bf16.msra.mxu0 0
        %941 = vmatprep.subr.bf16.mxu0 0
        %942 = vmatpush1.bf16.msra.mxu0 0
        %943 = vmatprep.subr.bf16.mxu0 0
        %944 = vmatpush1.bf16.msra.mxu0 0
        %945 = vmatprep.subr.bf16.mxu0 0
        %946 = vmatpush1.bf16.msra.mxu0 0
        %947 = vmatprep.subr.bf16.mxu0 0
        %948 = vmatpush1.bf16.msra.mxu0 0
        %949 = vmatprep.subr.bf16.mxu0 0
        %950 = vmatpush1.bf16.msra.mxu0 0
        %951 = vmatprep.subr.bf16.mxu0 0
        %952 = vmatpush1.bf16.msra.mxu0 0
        %953 = vmatprep.subr.bf16.mxu0 0
        %954 = vmatpush1.bf16.msra.mxu0 0
        %955 = vmatprep.subr.bf16.mxu0 0
        %956 = vmatpush1.bf16.msra.mxu0 0
        %957 = vmatprep.mubr.bf16.mxu0 0
        %958 = vmatmul.mubr.bf16.gmra.mrb[0].mxu0 %v920
        %v959 = vpop.f32.mrb[0].mxu0
        %v960 = vadd.f32 0.0, %v959
        %v961 = vpop.f32.mrb[0].mxu0
        %v962 = vpop.f32.mrb[0].mxu0
        %v963 = vpop.f32.mrb[0].mxu0
        %964 = vdwg.mxu0
        %v965 = vpack.c.bf16 %v960, %v960
        %v967 = vunpack.c.l.b16 %v965
        %v968 = vpack.c.b16 %v967, %v967
        %969 = vrot.lane.b32.xlu0 %v968, 16
        %v970 = vpop.permute.xlu0 %969
        %vm972 = vcmask 191616
        %973 = vst.msk [vmem:[#allocation2] sm:$0xf] %vm972, %v970
        %974 = vrot.lane.b32.xlu0 %v601, 104
        %v975 = vpop.permute.xlu0 %974
        %976 = vrot.lane.b32.xlu0 %v602, 104
        %v977 = vpop.permute.xlu0 %976
        %v979 = vsel %vm614, %v975, 0
        %v982 = vsel %vm614, %v977, 0
        %984 = vmatprep.subr.bf16.mxu0 0
        %985 = vmatpush1.bf16.xpose.msra.mxu0 %v982
        %986 = vmatprep.subr.bf16.mxu0 0
        %987 = vmatpush1.bf16.xpose.msra.mxu0 0
        %988 = vmatprep.subr.bf16.mxu0 0
        %989 = vmatpush1.bf16.xpose.msra.mxu0 0
        %990 = vmatprep.subr.bf16.mxu0 0
        %991 = vmatpush1.bf16.xpose.msra.mxu0 0
        %992 = vmatprep.subr.bf16.mxu0 0
        %993 = vmatpush1.bf16.xpose.msra.mxu0 0
        %994 = vmatprep.subr.bf16.mxu0 0
        %995 = vmatpush1.bf16.xpose.msra.mxu0 0
        %996 = vmatprep.subr.bf16.mxu0 0
        %997 = vmatpush1.bf16.xpose.msra.mxu0 0
        %998 = vmatprep.subr.bf16.mxu0 0
        %999 = vmatpush1.bf16.xpose.msra.mxu0 0
        %1000 = vmatprep.subr.bf16.mxu0 0
        %1001 = vmatpush1.bf16.xpose.msra.mxu0 0
        %1002 = vmatprep.subr.bf16.mxu0 0
        %1003 = vmatpush1.bf16.xpose.msra.mxu0 0
        %1004 = vmatprep.subr.bf16.mxu0 0
        %1005 = vmatpush1.bf16.xpose.msra.mxu0 0
        %1006 = vmatprep.subr.bf16.mxu0 0
        %1007 = vmatpush1.bf16.xpose.msra.mxu0 0
        %1008 = vmatprep.subr.bf16.mxu0 0
        %1009 = vmatpush1.bf16.xpose.msra.mxu0 0
        %1010 = vmatprep.subr.bf16.mxu0 0
        %1011 = vmatpush1.bf16.xpose.msra.mxu0 0
        %1012 = vmatprep.subr.bf16.mxu0 0
        %1013 = vmatpush1.bf16.xpose.msra.mxu0 0
        %1014 = vmatprep.subr.bf16.mxu0 0
        %1015 = vmatpush1.bf16.xpose.msra.mxu0 0
        %1016 = vmatprep.mubr.bf16.mxu0 0
        %1017 = vmatmul.mubr.bf16.gmra.mrb[0].mxu0 %v979
        %v1018 = vpop.f32.mrb[0].mxu0
        %v1019 = vadd.f32 0.0, %v1018
        %v1020 = vpop.f32.mrb[0].mxu0
        %v1021 = vpop.f32.mrb[0].mxu0
        %v1022 = vpop.f32.mrb[0].mxu0
        %1023 = vdwg.mxu0
        %v1024 = vsel %vm613, -inf, %v1019
        %v1025 = vsel %vm614, %v1024, -inf
        %1026 = vmax.xlane.f32.xlu0 %v1025
        %v1027 = vpop.xlane.xlu0 %1026
        %v1028 = vmax.f32 %v1027, -1e+30
        %v1029 = vsub.f32 %v1024, %v1028
        %v1030 = vmul.f32 %v1029, 1.442695
        %v1031 = vpow.pop %v1030
        %v1032 = vsel %vm614, %v1031, 0.0
        %1033 = vadd.xlane.f32.xlu0 %v1032
        %v1034 = vpop.xlane.xlu0 %1033
        %v1035 = vmax.f32 %v1034, 1e-30
        %v1036 = vrcp.pop %v1035
        %v1037 = vmul.f32 %v1031, %v1036
        %v1038 = vpack.c.bf16 %v1037, %v1037
        %1039 = vrot.lane.b32.xlu0 %v602, 72
        %v1040 = vpop.permute.xlu0 %1039
        %v1042 = vsel %vm614, %v1038, 0
        %v1045 = vsel %vm682, %v1040, 0
        %1047 = vmatprep.subr.bf16.mxu0 0
        %1048 = vmatpush1.bf16.msra.mxu0 %v1045
        %1049 = vmatprep.subr.bf16.mxu0 0
        %1050 = vmatpush1.bf16.msra.mxu0 0
        %1051 = vmatprep.subr.bf16.mxu0 0
        %1052 = vmatpush1.bf16.msra.mxu0 0
        %1053 = vmatprep.subr.bf16.mxu0 0
        %1054 = vmatpush1.bf16.msra.mxu0 0
        %1055 = vmatprep.subr.bf16.mxu0 0
        %1056 = vmatpush1.bf16.msra.mxu0 0
        %1057 = vmatprep.subr.bf16.mxu0 0
        %1058 = vmatpush1.bf16.msra.mxu0 0
        %1059 = vmatprep.subr.bf16.mxu0 0
        %1060 = vmatpush1.bf16.msra.mxu0 0
        %1061 = vmatprep.subr.bf16.mxu0 0
        %1062 = vmatpush1.bf16.msra.mxu0 0
        %1063 = vmatprep.subr.bf16.mxu0 0
        %1064 = vmatpush1.bf16.msra.mxu0 0
        %1065 = vmatprep.subr.bf16.mxu0 0
        %1066 = vmatpush1.bf16.msra.mxu0 0
        %1067 = vmatprep.subr.bf16.mxu0 0
        %1068 = vmatpush1.bf16.msra.mxu0 0
        %1069 = vmatprep.subr.bf16.mxu0 0
        %1070 = vmatpush1.bf16.msra.mxu0 0
        %1071 = vmatprep.subr.bf16.mxu0 0
        %1072 = vmatpush1.bf16.msra.mxu0 0
        %1073 = vmatprep.subr.bf16.mxu0 0
        %1074 = vmatpush1.bf16.msra.mxu0 0
        %1075 = vmatprep.subr.bf16.mxu0 0
        %1076 = vmatpush1.bf16.msra.mxu0 0
        %1077 = vmatprep.subr.bf16.mxu0 0
        %1078 = vmatpush1.bf16.msra.mxu0 0
        %1079 = vmatprep.mubr.bf16.mxu0 0
        %1080 = vmatmul.mubr.bf16.gmra.mrb[0].mxu0 %v1042
        %v1081 = vpop.f32.mrb[0].mxu0
        %v1082 = vadd.f32 0.0, %v1081
        %v1083 = vpop.f32.mrb[0].mxu0
        %v1084 = vpop.f32.mrb[0].mxu0
        %v1085 = vpop.f32.mrb[0].mxu0
        %1086 = vdwg.mxu0
        %v1087 = vpack.c.bf16 %v1082, %v1082
        %v1089 = vunpack.c.l.b16 %v1087
        %v1090 = vpack.c.b16 %v1089, %v1089
        %1091 = vrot.lane.b32.xlu0 %v1090, 24
        %v1092 = vpop.permute.xlu0 %1091
        %vm1094 = vcmask 257216
        %1095 = vst.msk [vmem:[#allocation2] sm:$0xf] %vm1094, %v1092
        %v1096 = vld [vmem:[#allocation2] sm:$0xf]
        %v1097 = vld [vmem:[%s8] sm:$0xf]
        %v1098 = vld [vmem:[%s8 + $0x4] sm:$0xf]
        %v1099 = vld [vmem:[%s8 + $0x8] sm:$0xf]
        %v1100 = vld [vmem:[%s8 + $0xc] sm:$0xf]
        %v1101 = vld [vmem:[%s9] sm:$0x1]
        %v1103 = vlaneseq
        %v1104 = vshrl.u32 %v1103, 7
        %v1105 = vsub.s32 0, %v1104
        %v1106 = vrot.slane %v1101, %v1105
        %v1112 = vunpack.c.l.b16 %v1097
        %v1113 = vunpack.c.l.b16 %v1098
        %v1114 = vunpack.c.l.b16 %v1099
        %v1115 = vunpack.c.l.b16 %v1100
        %v1116 = vpack.c.b16 %v1113, %v1112
        %v1117 = vpack.c.b16 %v1115, %v1114
        %v1121 = vsel %vm491, %v1096, 0
        %1123 = vmatprep.subr.bf16.mxu0 0
        %1124 = vmatpush1.bf16.msra.mxu0 %v1116
        %1125 = vmatprep.subr.bf16.mxu0 0
        %1126 = vmatpush1.bf16.msra.mxu0 %v1117
        %1127 = vmatprep.subr.bf16.mxu0 0
        %1128 = vmatpush1.bf16.msra.mxu0 0
        %1129 = vmatprep.subr.bf16.mxu0 0
        %1130 = vmatpush1.bf16.msra.mxu0 0
        %1131 = vmatprep.subr.bf16.mxu0 0
        %1132 = vmatpush1.bf16.msra.mxu0 0
        %1133 = vmatprep.subr.bf16.mxu0 0
        %1134 = vmatpush1.bf16.msra.mxu0 0
        %1135 = vmatprep.subr.bf16.mxu0 0
        %1136 = vmatpush1.bf16.msra.mxu0 0
        %1137 = vmatprep.subr.bf16.mxu0 0
        %1138 = vmatpush1.bf16.msra.mxu0 0
        %1139 = vmatprep.subr.bf16.mxu0 0
        %1140 = vmatpush1.bf16.msra.mxu0 0
        %1141 = vmatprep.subr.bf16.mxu0 0
        %1142 = vmatpush1.bf16.msra.mxu0 0
        %1143 = vmatprep.subr.bf16.mxu0 0
        %1144 = vmatpush1.bf16.msra.mxu0 0
        %1145 = vmatprep.subr.bf16.mxu0 0
        %1146 = vmatpush1.bf16.msra.mxu0 0
        %1147 = vmatprep.subr.bf16.mxu0 0
        %1148 = vmatpush1.bf16.msra.mxu0 0
        %1149 = vmatprep.subr.bf16.mxu0 0
        %1150 = vmatpush1.bf16.msra.mxu0 0
        %1151 = vmatprep.subr.bf16.mxu0 0
        %1152 = vmatpush1.bf16.msra.mxu0 0
        %1153 = vmatprep.subr.bf16.mxu0 0
        %1154 = vmatpush1.bf16.msra.mxu0 0
        %1155 = vmatprep.mubr.bf16.mxu0 0
        %1156 = vmatmul.mubr.bf16.gmra.mrb[0].mxu0 %v1121
        %v1157 = vpop.f32.mrb[0].mxu0
        %v1158 = vadd.f32 %v1106, %v1157
        %v1159 = vpop.f32.mrb[0].mxu0
        %v1160 = vpop.f32.mrb[0].mxu0
        %v1161 = vpop.f32.mrb[0].mxu0
        %1162 = vdwg.mxu0
        %1163 = vst.msk [vmem:[%s461] sm:$0xff] %vm491, %v1158
        %s1164 = sand.u32 %s264, 1
        %s1165 = scalar_lea.sflag [#allocation5], %s1164
        %s1166 = sand.u32 %s264, 1
        %s1167 = smul.addr %s1166, 8
        %s1168 = scalar_lea.vmem [#allocation12], %s1167
        // Predicated region
        $region81: #{tpu_custom_call.1} parent=59 // pred_check
          %p1169 = pneg %p274
        $region82: #{tpu_custom_call.1} parent=59 // pred_check_branch
          %1171 = sbr.rel (%p1169) target = $region84
        $region83: #{tpu_custom_call.1} parent=59 // pred_region
          %s1173 = ssub.s32 128, 128
          %1174 = vsyncadd %s1165, %s1173
          %s1175 = smul.addr %s31, 128
          %s1176 = scalar_lea.hbm %s10, %s1175
          %s1178 = sshll.u32 %s1168, 4
          %s1179 = int_to_ptr.vmem [resolvable:$true] %s1178
          %1181 = dma.vmem_to_hbm [thread:$0]  %s1179, 128, %s1176, %s1165
        $region84: #{tpu_custom_call.1} parent=59 // pred_fallthru
          _
      $region60: #{tpu_custom_call.1} parent=5 // pred_fallthru
        _
      %p1182 = scmp.le.s32.totalorder 2, %s26
      // Predicated region
      $region85: #{tpu_custom_call.1} parent=5 // pred_check
        %p1183 = pneg %p1182
      $region86: #{tpu_custom_call.1} parent=5 // pred_check_branch
        %1185 = sbr.rel (%p1183) target = $region88
      $region87: #{tpu_custom_call.1} parent=5 // pred_region
        %s1186 = ssub.s32 %s26, 2
        // Predicated region
        $region89: #{tpu_custom_call.1} parent=87 // pred_check
          %p1187 = pneg %p280
        $region90: #{tpu_custom_call.1} parent=87 // pred_check_branch
          %1189 = sbr.rel (%p1187) target = $region92
        $region91: #{tpu_custom_call.1} parent=87 // pred_region
          %s1190 = sand.u32 %s265, 1
          %s1191 = scalar_lea.sflag [#allocation5], %s1190
          %s1192 = sand.u32 %s265, 1
          %s1193 = smul.addr %s1192, 8
          %s1194 = scalar_lea.vmem [#allocation12], %s1193
          %1195 = dma.done %s1191, 128
        $region92: #{tpu_custom_call.1} parent=87 // pred_fallthru
          _
      $region88: #{tpu_custom_call.1} parent=5 // pred_fallthru
        _
    $region6: #{tpu_custom_call.1} parent=1 // loop_footer
      %s30 = sadd.s32 1, %s26
    $region7: #{tpu_custom_call.1} parent=1 // loop_footer_branch
      %25 = sbr.rel target = $region3
    $region8: #{tpu_custom_call.1} parent=1 // loop_exit
      _
    %1196 = vsyncpa [#allocation4], 1
    %s1197 = scalar_lea.sflag [#allocation4], 1
    %1198 = vsyncpa %s1197, 1
    %1199 = vsyncpa [#allocation7], 1
    %s1200 = scalar_lea.sflag [#allocation7], 1
    %1201 = vsyncpa %s1200, 1
    %1202 = vsyncpa [#allocation10], 1
    %1203 = vsyncpa [#allocation5], 1
    %s1204 = scalar_lea.sflag [#allocation5], 1
    %1205 = vsyncpa %s1204, 1

</llo_original>
